<compile_context>
chip_gen: v6e
topology: v6e:2x2x1
jax: 0.10.0
libtpu: 0.0.40
codegen_flags: <defaults>
</compile_context>

<pallas_src>
import functools

import jax
import jax.numpy as jnp
from jax.experimental import pallas as pl
from jax.experimental.pallas import tpu as pltpu


_IMAGE_SHAPES = {"mnist": (1, 28, 28), "cifar10": (3, 32, 32)}
_HIDDEN_DIMS = {"mnist": (512, 256), "cifar10": (1024, 512, 256)}
_LANE = 128
_BF16_SUBLANE = 16       # one bf16 vreg holds 16 sublanes


def _round_up(x, m):
    return ((x + m - 1) // m) * m


def _cdiv(a, b):
    return -(-a // b)


def _leaky_relu(x, negative_slope=0.2):
    return jnp.where(x >= 0, x, negative_slope * x)


def _mlp_kernel(*refs, num_layers):
    """refs = (x_ref, w1_ref, b1_ref, ..., wL_ref, bL_ref, o_ref).

    x arrives as f32 straight from HBM (no wrapper pad/cast pass) and is cast to
    bf16 in-kernel for the MXU; weights are bf16, accumulation is f32. Biases,
    LeakyReLU and the final Sigmoid stay in f32. The last layer is padded to 128
    output lanes so the final store is lane-dense (unmasked vst)."""
    x_ref, o_ref = refs[0], refs[-1]
    h = x_ref[...].astype(jnp.bfloat16)                       # bf16 [TM, D]
    for l in range(num_layers):
        w = refs[1 + 2 * l][...]                              # bf16 [K, N]
        b = refs[2 + 2 * l][...]                              # f32  [1, N]
        z = jnp.dot(h, w, preferred_element_type=jnp.float32) + b
        if l + 1 < num_layers:
            h = _leaky_relu(z, 0.2).astype(jnp.bfloat16)      # back to bf16 for MXU
        else:
            # Sigmoid: exp + approximate reciprocal, both on the EUP slot.
            # (Use jax.nn.sigmoid / approx=False if feeding a log-sensitive BCE.)
            o_ref[...] = pl.reciprocal(1.0 + jnp.exp(-z), approx=True)


def pack_params(params):
    """Pad + cast raw f32 params ([in,out] weights, [1,out] biases) for the kernel.

    Output widths are zero-padded to a 128-lane multiple (1 -> 128 on the final
    layer); layer 0 keeps its raw K (784 / 3072) so x needs NO feature padding —
    a full-extent block dim is legal. Deeper layers' K matches the previous padded
    width. Weights are cast to bf16 (halves weight HBM/VMEM traffic, feeds the bf16
    MXU); biases stay f32. Zero padding is mathematically inert for this MLP.
    Do this once, outside the hot path."""
    num_layers = len(params) // 2
    packed = []
    prev_n_pad = None
    for l in range(num_layers):
        w = params[2 * l]
        b = params[2 * l + 1]
        k, n = w.shape
        n_pad = _round_up(n, _LANE)
        k_pad = k if l == 0 else prev_n_pad
        if (k_pad, n_pad) != (k, n):
            w = jnp.pad(w, ((0, k_pad - k), (0, n_pad - n)))
        if n_pad != n:
            b = jnp.pad(b, ((0, 0), (0, n_pad - n)))
        packed.append(w.astype(jnp.bfloat16))
        packed.append(b.astype(jnp.float32))
        prev_n_pad = n_pad
    return packed


def discriminator_forward(img, packed_params, *, batch_tile=512):
    """img: [B, C, H, W] float32 (NCHW, like PyTorch). Returns [B, 1] float32.

    `batch_tile`: max rows of the batch per grid step (512 amortises the ~0.35 us
    per-step pipeline overhead while keeping the working set well under the 32 MiB
    default scoped VMEM even for cifar10 on v7x); automatically shrunk so small /
    medium batches still produce >=2 grid steps for megacore sharding."""
    B = img.shape[0]
    x = img.reshape(B, -1).astype(jnp.float32)                # [B, D], no D padding
    D = x.shape[1]

    num_layers = len(packed_params) // 2
    weight_shapes = [packed_params[2 * l].shape for l in range(num_layers)]
    assert weight_shapes[0][0] == D, (weight_shapes[0], D)
    N_out = weight_shapes[-1][1]                              # 128 (padded from 1)

    # Batch tiling: >=16 rows (bf16 sublane packing), <= batch_tile, and aim for
    # >=2 grid steps so the "parallel" axis actually uses both v7x TensorCores.
    tm = _round_up(max(_BF16_SUBLANE, min(batch_tile, _cdiv(B, 2))), _BF16_SUBLANE)
    # Pad B only to the sublane multiple, NOT to a tile multiple; the grid takes a
    # partial trailing block instead of wasted full-tile FLOPs / DMA.
    B_pad = _round_up(B, _BF16_SUBLANE)
    if B_pad != B:
        x = jnp.pad(x, ((0, B_pad - B), (0, 0)))
    grid = (_cdiv(B_pad, tm),)

    in_specs = [pl.BlockSpec((tm, D), lambda i: (i, 0))]      # x tile (f32)
    for l in range(num_layers):
        k, n = weight_shapes[l]
        in_specs.append(pl.BlockSpec((k, n), lambda i: (0, 0)))   # weight (resident)
        in_specs.append(pl.BlockSpec((1, n), lambda i: (0, 0)))   # bias   (resident)

    rows = grid[0] * tm
    flops = 2 * rows * sum(k * n for k, n in weight_shapes)
    bytes_accessed = (
        int(x.size) * 4
        + sum(int(p.size) * p.dtype.itemsize for p in packed_params)
        + B_pad * N_out * 4)
    cost = pl.CostEstimate(flops=flops,
                           transcendentals=rows * N_out,      # sigmoid exp
                           bytes_accessed=bytes_accessed)

    out = pl.pallas_call(
        functools.partial(_mlp_kernel, num_layers=num_layers),
        out_shape=jax.ShapeDtypeStruct((B_pad, N_out), jnp.float32),
        grid_spec=pltpu.PrefetchScalarGridSpec(
            num_scalar_prefetch=0,
            grid=grid,
            in_specs=in_specs,
            out_specs=pl.BlockSpec((tm, N_out), lambda i: (i, 0)),
        ),
        compiler_params=pltpu.CompilerParams(
            dimension_semantics=("parallel",),                # megacore-shardable
            vmem_limit_bytes=64 * 1024 * 1024,                # headroom for cifar10 W1
        ),
        cost_estimate=cost,
    )(x, *packed_params)

    # Only lane 0 and the first B rows are real; the rest is padding.
    return out[:B, :1]


def init_discriminator_params(key, model_type="mnist"):
    """Deterministic init mirroring nn.Linear's U(-1/sqrt(in), 1/sqrt(in)).
    Weights stored as [in, out] (transposed from PyTorch), biases as [1, out]."""
    image_shape = _IMAGE_SHAPES[model_type]
    d_in = int(image_shape[0] * image_shape[1] * image_shape[2])
    dims = [d_in, *(_HIDDEN_DIMS[model_type]), 1]

    params = []
    for fan_in, fan_out in zip(dims[:-1], dims[1:]):
        key, kw, kb = jax.random.split(key, 3)
        bound = 1.0 / jnp.sqrt(jnp.float32(fan_in))
        w = jax.random.uniform(kw, (fan_in, fan_out), jnp.float32, -bound, bound)
        b = jax.random.uniform(kb, (1, fan_out), jnp.float32, -bound, bound)
        params.extend([w, b])
    return params, image_shape


def _reference_forward(img, params):
    """Pure-JAX reference using the same bf16-operand / f32-accumulation matmul recipe."""
    x = img.reshape(img.shape[0], -1).astype(jnp.float32)
    num_layers = len(params) // 2
    h = x
    for l in range(num_layers):
        w, b = params[2 * l], params[2 * l + 1]
        z = jnp.dot(h.astype(jnp.bfloat16), w.astype(jnp.bfloat16),
                    preferred_element_type=jnp.float32) + b
        if l + 1 < num_layers:
            h = _leaky_relu(z, 0.2)
        else:
            return jax.nn.sigmoid(z)


if __name__ == "__main__":
    key = jax.random.PRNGKey(0)
    k_params, k_img = jax.random.split(key)

    # mnist variant of the Discriminator; small batch.
    params, image_shape = init_discriminator_params(k_params, "mnist")
    packed = pack_params(params)

    B = 8
    img = jax.random.normal(k_img, (B, *image_shape), dtype=jnp.float32)

    out = discriminator_forward(img, packed)
    out = jax.block_until_ready(out)

    ref = _reference_forward(img, params)
    assert out.shape == (B, 1), out.shape
    assert jnp.allclose(out, ref, atol=5e-3, rtol=5e-3), (
        "mismatch vs JAX reference, max abs err = "
        f"{float(jnp.max(jnp.abs(out - ref)))}")

    print("KERNEL_OK")
</pallas_src>

<mosaic_0001>
module attributes {stable_mosaic.version = 11 : i64} {
  func.func @_mlp_kernel(%arg0: i32, %arg1: memref<16x784xf32, #tpu.memory_space<vmem>>, %arg2: memref<784x512xbf16, #tpu.memory_space<vmem>>, %arg3: memref<1x512xf32, #tpu.memory_space<vmem>>, %arg4: memref<512x256xbf16, #tpu.memory_space<vmem>>, %arg5: memref<1x256xf32, #tpu.memory_space<vmem>>, %arg6: memref<256x128xbf16, #tpu.memory_space<vmem>>, %arg7: memref<1x128xf32, #tpu.memory_space<vmem>>, %arg8: memref<16x128xf32, #tpu.memory_space<vmem>>) attributes {dimension_semantics = [#tpu.dimension_semantics<parallel>], iteration_bounds = array<i64: 1>, scalar_prefetch = 0 : i64, scratch_operands = 0 : i64, tpu.core_type = #tpu.core_type<tc>, window_params = [{transform_indices = @transform_0, window_bounds = array<i64: 16, 784>}, {pipeline_mode = #tpu.pipeline_mode<synchronous>, transform_indices = @transform_1, window_bounds = array<i64: 784, 512>}, {pipeline_mode = #tpu.pipeline_mode<synchronous>, transform_indices = @transform_2, window_bounds = array<i64: 1, 512>}, {pipeline_mode = #tpu.pipeline_mode<synchronous>, transform_indices = @transform_3, window_bounds = array<i64: 512, 256>}, {pipeline_mode = #tpu.pipeline_mode<synchronous>, transform_indices = @transform_4, window_bounds = array<i64: 1, 256>}, {pipeline_mode = #tpu.pipeline_mode<synchronous>, transform_indices = @transform_5, window_bounds = array<i64: 256, 128>}, {pipeline_mode = #tpu.pipeline_mode<synchronous>, transform_indices = @transform_6, window_bounds = array<i64: 1, 128>}, {transform_indices = @transform_7, window_bounds = array<i64: 16, 128>}]} {
    %c0 = arith.constant 0 : index
    %c0_0 = arith.constant 0 : index
    %0 = vector.load %arg1[%c0, %c0_0] : memref<16x784xf32, #tpu.memory_space<vmem>>, vector<16x784xf32>
    %1 = arith.truncf %0 : vector<16x784xf32> to vector<16x784xbf16>
    %c0_1 = arith.constant 0 : index
    %c0_2 = arith.constant 0 : index
    %2 = vector.load %arg2[%c0_1, %c0_2] : memref<784x512xbf16, #tpu.memory_space<vmem>>, vector<784x512xbf16>
    %c0_3 = arith.constant 0 : index
    %c0_4 = arith.constant 0 : index
    %3 = vector.load %arg3[%c0_3, %c0_4] : memref<1x512xf32, #tpu.memory_space<vmem>>, vector<1x512xf32>
    %cst = arith.constant dense<0.000000e+00> : vector<16x512xf32>
    %4 = tpu.matmul %1, %2, %cst {dimension_numbers = #tpu.dot_dimension_numbers<[1], [0], [0], [1], [0, 0, 1, 1], [], []>} : vector<16x784xbf16>, vector<784x512xbf16>, vector<16x512xf32> -> vector<16x512xf32>
    %5 = vector.broadcast %3 : vector<1x512xf32> to vector<16x512xf32>
    %6 = arith.addf %4, %5 : vector<16x512xf32>
    %cst_5 = arith.constant 0.000000e+00 : f32
    %7 = vector.broadcast %cst_5 : f32 to vector<16x512xf32>
    %8 = arith.cmpf oge, %6, %7 : vector<16x512xf32>
    %cst_6 = arith.constant 2.000000e-01 : f32
    %9 = vector.broadcast %cst_6 : f32 to vector<16x512xf32>
    %10 = arith.mulf %9, %6 : vector<16x512xf32>
    %11 = arith.select %8, %6, %10 : vector<16x512xi1>, vector<16x512xf32>
    %12 = arith.truncf %11 : vector<16x512xf32> to vector<16x512xbf16>
    %c0_7 = arith.constant 0 : index
    %c0_8 = arith.constant 0 : index
    %13 = vector.load %arg4[%c0_7, %c0_8] : memref<512x256xbf16, #tpu.memory_space<vmem>>, vector<512x256xbf16>
    %c0_9 = arith.constant 0 : index
    %c0_10 = arith.constant 0 : index
    %14 = vector.load %arg5[%c0_9, %c0_10] : memref<1x256xf32, #tpu.memory_space<vmem>>, vector<1x256xf32>
    %cst_11 = arith.constant dense<0.000000e+00> : vector<16x256xf32>
    %15 = tpu.matmul %12, %13, %cst_11 {dimension_numbers = #tpu.dot_dimension_numbers<[1], [0], [0], [1], [0, 0, 1, 1], [], []>} : vector<16x512xbf16>, vector<512x256xbf16>, vector<16x256xf32> -> vector<16x256xf32>
    %16 = vector.broadcast %14 : vector<1x256xf32> to vector<16x256xf32>
    %17 = arith.addf %15, %16 : vector<16x256xf32>
    %cst_12 = arith.constant 0.000000e+00 : f32
    %18 = vector.broadcast %cst_12 : f32 to vector<16x256xf32>
    %19 = arith.cmpf oge, %17, %18 : vector<16x256xf32>
    %cst_13 = arith.constant 2.000000e-01 : f32
    %20 = vector.broadcast %cst_13 : f32 to vector<16x256xf32>
    %21 = arith.mulf %20, %17 : vector<16x256xf32>
    %22 = arith.select %19, %17, %21 : vector<16x256xi1>, vector<16x256xf32>
    %23 = arith.truncf %22 : vector<16x256xf32> to vector<16x256xbf16>
    %c0_14 = arith.constant 0 : index
    %c0_15 = arith.constant 0 : index
    %24 = vector.load %arg6[%c0_14, %c0_15] : memref<256x128xbf16, #tpu.memory_space<vmem>>, vector<256x128xbf16>
    %c0_16 = arith.constant 0 : index
    %c0_17 = arith.constant 0 : index
    %25 = vector.load %arg7[%c0_16, %c0_17] : memref<1x128xf32, #tpu.memory_space<vmem>>, vector<1x128xf32>
    %cst_18 = arith.constant dense<0.000000e+00> : vector<16x128xf32>
    %26 = tpu.matmul %23, %24, %cst_18 {dimension_numbers = #tpu.dot_dimension_numbers<[1], [0], [0], [1], [0, 0, 1, 1], [], []>} : vector<16x256xbf16>, vector<256x128xbf16>, vector<16x128xf32> -> vector<16x128xf32>
    %27 = vector.broadcast %25 : vector<1x128xf32> to vector<16x128xf32>
    %28 = arith.addf %26, %27 : vector<16x128xf32>
    %cst_19 = arith.constant 0.000000e+00 : f32
    %29 = vector.broadcast %cst_19 : f32 to vector<16x128xf32>
    %30 = arith.subf %29, %28 : vector<16x128xf32>
    %31 = math.exp %30 : vector<16x128xf32>
    %cst_20 = arith.constant 1.000000e+00 : f32
    %32 = vector.broadcast %cst_20 : f32 to vector<16x128xf32>
    %33 = arith.addf %32, %31 : vector<16x128xf32>
    %34 = tpu.reciprocal %33 {approx = true} : vector<16x128xf32> -> vector<16x128xf32>
    %c0_21 = arith.constant 0 : index
    %c0_22 = arith.constant 0 : index
    %35 = vector.load %arg8[%c0_21, %c0_22] : memref<16x128xf32, #tpu.memory_space<vmem>>, vector<16x128xf32>
    tpu.vector_store %arg8[%c0_21, %c0_22], %34 {strides = array<i32>} : memref<16x128xf32, #tpu.memory_space<vmem>>, vector<16x128xf32>,
    return
  }
  func.func @transform_0(%arg0: i32) -> (i32, i32) {
    %c0_i32 = arith.constant 0 : i32
    %c0_i32_0 = arith.constant 0 : i32
    return %arg0, %c0_i32 : i32, i32
  }
  func.func @transform_1(%arg0: i32) -> (i32, i32) {
    %c0_i32 = arith.constant 0 : i32
    %c0_i32_0 = arith.constant 0 : i32
    %c0_i32_1 = arith.constant 0 : i32
    return %c0_i32, %c0_i32_0 : i32, i32
  }
  func.func @transform_2(%arg0: i32) -> (i32, i32) {
    %c0_i32 = arith.constant 0 : i32
    %c0_i32_0 = arith.constant 0 : i32
    %c0_i32_1 = arith.constant 0 : i32
    return %c0_i32, %c0_i32_0 : i32, i32
  }
  func.func @transform_3(%arg0: i32) -> (i32, i32) {
    %c0_i32 = arith.constant 0 : i32
    %c0_i32_0 = arith.constant 0 : i32
    %c0_i32_1 = arith.constant 0 : i32
    return %c0_i32, %c0_i32_0 : i32, i32
  }
  func.func @transform_4(%arg0: i32) -> (i32, i32) {
    %c0_i32 = arith.constant 0 : i32
    %c0_i32_0 = arith.constant 0 : i32
    %c0_i32_1 = arith.constant 0 : i32
    return %c0_i32, %c0_i32_0 : i32, i32
  }
  func.func @transform_5(%arg0: i32) -> (i32, i32) {
    %c0_i32 = arith.constant 0 : i32
    %c0_i32_0 = arith.constant 0 : i32
    %c0_i32_1 = arith.constant 0 : i32
    return %c0_i32, %c0_i32_0 : i32, i32
  }
  func.func @transform_6(%arg0: i32) -> (i32, i32) {
    %c0_i32 = arith.constant 0 : i32
    %c0_i32_0 = arith.constant 0 : i32
    %c0_i32_1 = arith.constant 0 : i32
    return %c0_i32, %c0_i32_0 : i32, i32
  }
  func.func @transform_7(%arg0: i32) -> (i32, i32) {
    %c0_i32 = arith.constant 0 : i32
    %c0_i32_0 = arith.constant 0 : i32
    return %arg0, %c0_i32 : i32, i32
  }
}

</mosaic_0001>

<llo_original>
// kernel: tpu_custom_call.1
$region0: #{tpu_custom_call.1}
  #allocation0 [shape = 'u32[]', space=smem, size = 0x4, offset = 0x4, fixed_abs, tag = 'smem constant byte address 0x4 - core index']
  #allocation1 [shape = 'u32[144,128]{1,0:T(1,128)}', space=vmem, size = 0x12000, scoped, tag = 'internal scratch']
  %s0 = inlined_call_operand.hbm [shape: f32[16,784], index: 0, kind: input, shape index: {}]
  %s1 = inlined_call_operand.hbm [shape: bf16[784,512], index: 1, kind: input, shape index: {}]
  %s2 = inlined_call_operand.hbm [shape: f32[1,512], index: 2, kind: input, shape index: {}]
  %s3 = inlined_call_operand.hbm [shape: bf16[512,256], index: 3, kind: input, shape index: {}]
  %s4 = inlined_call_operand.vmem [shape: f32[1,256], index: 4, kind: input, shape index: {}]
  %s5 = inlined_call_operand.hbm [shape: bf16[256,128], index: 5, kind: input, shape index: {}]
  %s6 = inlined_call_operand.vmem [shape: f32[1,128], index: 6, kind: input, shape index: {}]
  %s7 = inlined_call_operand.hbm [shape: f32[16,128], index: 7, kind: output, shape index: {}]
  %s8 = sld [smem:[#allocation0]]
  $region58: #{tpu_custom_call.1} parent=0
    _
  %s10 = ssub.s32 1, %s8
  %s11 = scalar_select 0, %s10, %s8
  $region1: #{tpu_custom_call.1} parent=0
    #allocation2 [shape = 'u8[57344]{0}', space=vmem, size = 0xe000, scoped, tag = 'input window, operand 0, single buffered']
    #allocation3 [shape = 's32[1]{0}', space=sflag, size = 0x4, scoped, tag = 'scoped memory for tpu_custom_call.1']
    #allocation4 [shape = 's32[1]{0}', space=sflag, size = 0x4, scoped, tag = 'scoped memory for tpu_custom_call.1']
    #allocation5 [shape = 'u8[802816]{0}', space=vmem, size = 0xc4000, scoped, tag = 'input window, operand 1, single buffered']
    #allocation6 [shape = 's32[1]{0}', space=sflag, size = 0x4, scoped, tag = 'scoped memory for tpu_custom_call.1']
    #allocation7 [shape = 'u8[2048]{0}', space=vmem, size = 0x800, scoped, tag = 'input window, operand 2, single buffered']
    #allocation8 [shape = 'u8[262144]{0}', space=vmem, size = 0x40000, scoped, tag = 'input window, operand 3, single buffered']
    #allocation9 [shape = 's32[1]{0}', space=sflag, size = 0x4, scoped, tag = 'scoped memory for tpu_custom_call.1']
    #allocation10 [shape = 'u8[65536]{0}', space=vmem, size = 0x10000, scoped, tag = 'input window, operand 5, single buffered']
    #allocation11 [shape = 'u8[8192]{0}', space=vmem, size = 0x2000, scoped, tag = 'output window, operand 0, single buffered']
    %12 = vsyncpa [#allocation3], 0
    %13 = vsyncpa [#allocation6], 0
    %14 = vsyncpa [#allocation9], 0
    %15 = vsyncpa [#allocation4], 0
    // Predicated region
    $region2: #{tpu_custom_call.1} parent=1 // pred_check
      _
    $region3: #{tpu_custom_call.1} parent=1 // pred_check_branch
      %17 = sbr.rel (0) target = $region5
    $region4: #{tpu_custom_call.1} parent=1 // pred_region
      %s19 = ssub.s32 1792, 1792
      %20 = vsyncadd [#allocation3], %s19
      %s21 = sshll.u32 [#allocation2], 4
      %s22 = int_to_ptr.vmem [resolvable:$true] %s21
      %27 = dma.hbm_to_vmem [thread:$0]  %s0, 1792, %s22, [#allocation3], 896, 896, 56
    $region5: #{tpu_custom_call.1} parent=1 // pred_fallthru
      _
    // Predicated region
    $region6: #{tpu_custom_call.1} parent=1 // pred_check
      _
    $region7: #{tpu_custom_call.1} parent=1 // pred_check_branch
      %29 = sbr.rel (0) target = $region9
    $region8: #{tpu_custom_call.1} parent=1 // pred_region
      %s31 = ssub.s32 25088, 25088
      %32 = vsyncadd [#allocation6], %s31
      %s33 = sshll.u32 [#allocation5], 4
      %s34 = int_to_ptr.vmem [resolvable:$true] %s33
      %39 = dma.hbm_to_vmem [thread:$0]  %s1, 25088, %s34, [#allocation6], 256, 256, 16
    $region9: #{tpu_custom_call.1} parent=1 // pred_fallthru
      _
    // Predicated region
    $region10: #{tpu_custom_call.1} parent=1 // pred_check
      _
    $region11: #{tpu_custom_call.1} parent=1 // pred_check_branch
      %41 = sbr.rel (0) target = $region13
    $region12: #{tpu_custom_call.1} parent=1 // pred_region
      %s43 = ssub.s32 64, 64
      %44 = vsyncadd [#allocation6], %s43
      %s46 = sshll.u32 [#allocation7], 4
      %s47 = int_to_ptr.vmem [resolvable:$true] %s46
      %49 = dma.hbm_to_vmem [thread:$0]  %s2, 64, %s47, [#allocation6]
    $region13: #{tpu_custom_call.1} parent=1 // pred_fallthru
      _
    // Predicated region
    $region14: #{tpu_custom_call.1} parent=1 // pred_check
      _
    $region15: #{tpu_custom_call.1} parent=1 // pred_check_branch
      %51 = sbr.rel (0) target = $region17
    $region16: #{tpu_custom_call.1} parent=1 // pred_region
      %s53 = ssub.s32 8192, 8192
      %54 = vsyncadd [#allocation9], %s53
      %s55 = sshll.u32 [#allocation8], 4
      %s56 = int_to_ptr.vmem [resolvable:$true] %s55
      %61 = dma.hbm_to_vmem [thread:$0]  %s3, 8192, %s56, [#allocation9], 128, 128, 8
    $region17: #{tpu_custom_call.1} parent=1 // pred_fallthru
      _
    // Predicated region
    $region18: #{tpu_custom_call.1} parent=1 // pred_check
      _
    $region19: #{tpu_custom_call.1} parent=1 // pred_check_branch
      %63 = sbr.rel (0) target = $region21
    $region20: #{tpu_custom_call.1} parent=1 // pred_region
      _
    $region21: #{tpu_custom_call.1} parent=1 // pred_fallthru
      _
    // Predicated region
    $region22: #{tpu_custom_call.1} parent=1 // pred_check
      _
    $region23: #{tpu_custom_call.1} parent=1 // pred_check_branch
      %65 = sbr.rel (0) target = $region25
    $region24: #{tpu_custom_call.1} parent=1 // pred_region
      %s67 = ssub.s32 2048, 2048
      %68 = vsyncadd [#allocation9], %s67
      %s69 = sshll.u32 [#allocation10], 4
      %s70 = int_to_ptr.vmem [resolvable:$true] %s69
      %75 = dma.hbm_to_vmem [thread:$0]  %s5, 2048, %s70, [#allocation9], 64, 64, 4
    $region25: #{tpu_custom_call.1} parent=1 // pred_fallthru
      _
    // Predicated region
    $region26: #{tpu_custom_call.1} parent=1 // pred_check
      _
    $region27: #{tpu_custom_call.1} parent=1 // pred_check_branch
      %77 = sbr.rel (0) target = $region29
    $region28: #{tpu_custom_call.1} parent=1 // pred_region
      _
    $region29: #{tpu_custom_call.1} parent=1 // pred_fallthru
      _
    // Predicated region
    $region30: #{tpu_custom_call.1} parent=1 // pred_check
      _
    $region31: #{tpu_custom_call.1} parent=1 // pred_check_branch
      %79 = sbr.rel (0) target = $region33
    $region32: #{tpu_custom_call.1} parent=1 // pred_region
      %80 = dma.done [#allocation3], 1792
    $region33: #{tpu_custom_call.1} parent=1 // pred_fallthru
      _
    // Predicated region
    $region34: #{tpu_custom_call.1} parent=1 // pred_check
      _
    $region35: #{tpu_custom_call.1} parent=1 // pred_check_branch
      %82 = sbr.rel (0) target = $region37
    $region36: #{tpu_custom_call.1} parent=1 // pred_region
      %83 = dma.done [#allocation6], 25088
    $region37: #{tpu_custom_call.1} parent=1 // pred_fallthru
      _
    // Predicated region
    $region38: #{tpu_custom_call.1} parent=1 // pred_check
      _
    $region39: #{tpu_custom_call.1} parent=1 // pred_check_branch
      %85 = sbr.rel (0) target = $region41
    $region40: #{tpu_custom_call.1} parent=1 // pred_region
      %86 = dma.done [#allocation6], 64
    $region41: #{tpu_custom_call.1} parent=1 // pred_fallthru
      _
    // Predicated region
    $region42: #{tpu_custom_call.1} parent=1 // pred_check
      _
    $region43: #{tpu_custom_call.1} parent=1 // pred_check_branch
      %88 = sbr.rel (0) target = $region45
    $region44: #{tpu_custom_call.1} parent=1 // pred_region
      %89 = dma.done [#allocation9], 8192
    $region45: #{tpu_custom_call.1} parent=1 // pred_fallthru
      _
    // Predicated region
    $region46: #{tpu_custom_call.1} parent=1 // pred_check
      _
    $region47: #{tpu_custom_call.1} parent=1 // pred_check_branch
      %91 = sbr.rel (0) target = $region49
    $region48: #{tpu_custom_call.1} parent=1 // pred_region
      %92 = dma.done [#allocation9], 2048
    $region49: #{tpu_custom_call.1} parent=1 // pred_fallthru
      _
    %v94 = vld [vmem:[#allocation2] sm:$0xff]
    %v95 = vld [vmem:[#allocation2 + $0x8] sm:$0xff]
    %v96 = vld [vmem:[#allocation2 + $0x10] sm:$0xff]
    %v97 = vld [vmem:[#allocation2 + $0x18] sm:$0xff]
    %v98 = vld [vmem:[#allocation2 + $0x20] sm:$0xff]
    %v99 = vld [vmem:[#allocation2 + $0x28] sm:$0xff]
    %v100 = vld [vmem:[#allocation2 + $0x30] sm:$0xff]
    %v101 = vld [vmem:[#allocation2 + $0x38] sm:$0xff]
    %v102 = vld [vmem:[#allocation2 + $0x40] sm:$0xff]
    %v103 = vld [vmem:[#allocation2 + $0x48] sm:$0xff]
    %v104 = vld [vmem:[#allocation2 + $0x50] sm:$0xff]
    %v105 = vld [vmem:[#allocation2 + $0x58] sm:$0xff]
    %v106 = vld [vmem:[#allocation2 + $0x60] sm:$0xff]
    %v107 = vld [vmem:[#allocation2 + $0x68] sm:$0xff]
    %v108 = vpack.c.bf16 %v101, %v94
    %v109 = vpack.c.bf16 %v102, %v95
    %v110 = vpack.c.bf16 %v103, %v96
    %v111 = vpack.c.bf16 %v104, %v97
    %v112 = vpack.c.bf16 %v105, %v98
    %v113 = vpack.c.bf16 %v106, %v99
    %v114 = vpack.c.bf16 %v107, %v100
    %v115 = vld [vmem:[#allocation5] sm:$0xff]
    %v116 = vld [vmem:[#allocation5 + $0x8] sm:$0xff]
    %v117 = vld [vmem:[#allocation5 + $0x10] sm:$0xff]
    %v118 = vld [vmem:[#allocation5 + $0x18] sm:$0xff]
    %v119 = vld [vmem:[#allocation5 + $0x20] sm:$0xff]
    %v120 = vld [vmem:[#allocation5 + $0x28] sm:$0xff]
    %v121 = vld [vmem:[#allocation5 + $0x30] sm:$0xff]
    %v122 = vld [vmem:[#allocation5 + $0x38] sm:$0xff]
    %v123 = vld [vmem:[#allocation5 + $0x40] sm:$0xff]
    %v124 = vld [vmem:[#allocation5 + $0x48] sm:$0xff]
    %v125 = vld [vmem:[#allocation5 + $0x50] sm:$0xff]
    %v126 = vld [vmem:[#allocation5 + $0x58] sm:$0xff]
    %v127 = vld [vmem:[#allocation5 + $0x60] sm:$0xff]
    %v128 = vld [vmem:[#allocation5 + $0x68] sm:$0xff]
    %v129 = vld [vmem:[#allocation5 + $0x70] sm:$0xff]
    %v130 = vld [vmem:[#allocation5 + $0x78] sm:$0xff]
    %v131 = vld [vmem:[#allocation5 + $0x80] sm:$0xff]
    %v132 = vld [vmem:[#allocation5 + $0x88] sm:$0xff]
    %v133 = vld [vmem:[#allocation5 + $0x90] sm:$0xff]
    %v134 = vld [vmem:[#allocation5 + $0x98] sm:$0xff]
    %v135 = vld [vmem:[#allocation5 + $0xa0] sm:$0xff]
    %v136 = vld [vmem:[#allocation5 + $0xa8] sm:$0xff]
    %v137 = vld [vmem:[#allocation5 + $0xb0] sm:$0xff]
    %v138 = vld [vmem:[#allocation5 + $0xb8] sm:$0xff]
    %v139 = vld [vmem:[#allocation5 + $0xc0] sm:$0xff]
    %v140 = vld [vmem:[#allocation5 + $0xc8] sm:$0xff]
    %v141 = vld [vmem:[#allocation5 + $0xd0] sm:$0xff]
    %v142 = vld [vmem:[#allocation5 + $0xd8] sm:$0xff]
    %v143 = vld [vmem:[#allocation5 + $0xe0] sm:$0xff]
    %v144 = vld [vmem:[#allocation5 + $0xe8] sm:$0xff]
    %v145 = vld [vmem:[#allocation5 + $0xf0] sm:$0xff]
    %v146 = vld [vmem:[#allocation5 + $0xf8] sm:$0xff]
    %v147 = vld [vmem:[#allocation5 + $0x100] sm:$0xff]
    %v148 = vld [vmem:[#allocation5 + $0x108] sm:$0xff]
    %v149 = vld [vmem:[#allocation5 + $0x110] sm:$0xff]
    %v150 = vld [vmem:[#allocation5 + $0x118] sm:$0xff]
    %v151 = vld [vmem:[#allocation5 + $0x120] sm:$0xff]
    %v152 = vld [vmem:[#allocation5 + $0x128] sm:$0xff]
    %v153 = vld [vmem:[#allocation5 + $0x130] sm:$0xff]
    %v154 = vld [vmem:[#allocation5 + $0x138] sm:$0xff]
    %v155 = vld [vmem:[#allocation5 + $0x140] sm:$0xff]
    %v156 = vld [vmem:[#allocation5 + $0x148] sm:$0xff]
    %v157 = vld [vmem:[#allocation5 + $0x150] sm:$0xff]
    %v158 = vld [vmem:[#allocation5 + $0x158] sm:$0xff]
    %v159 = vld [vmem:[#allocation5 + $0x160] sm:$0xff]
    %v160 = vld [vmem:[#allocation5 + $0x168] sm:$0xff]
    %v161 = vld [vmem:[#allocation5 + $0x170] sm:$0xff]
    %v162 = vld [vmem:[#allocation5 + $0x178] sm:$0xff]
    %v163 = vld [vmem:[#allocation5 + $0x180] sm:$0xff]
    %v164 = vld [vmem:[#allocation5 + $0x188] sm:$0xff]
    %v165 = vld [vmem:[#allocation5 + $0x190] sm:$0xff]
    %v166 = vld [vmem:[#allocation5 + $0x198] sm:$0xff]
    %v167 = vld [vmem:[#allocation5 + $0x1a0] sm:$0xff]
    %v168 = vld [vmem:[#allocation5 + $0x1a8] sm:$0xff]
    %v169 = vld [vmem:[#allocation5 + $0x1b0] sm:$0xff]
    %v170 = vld [vmem:[#allocation5 + $0x1b8] sm:$0xff]
    %v171 = vld [vmem:[#allocation5 + $0x1c0] sm:$0xff]
    %v172 = vld [vmem:[#allocation5 + $0x1c8] sm:$0xff]
    %v173 = vld [vmem:[#allocation5 + $0x1d0] sm:$0xff]
    %v174 = vld [vmem:[#allocation5 + $0x1d8] sm:$0xff]
    %v175 = vld [vmem:[#allocation5 + $0x1e0] sm:$0xff]
    %v176 = vld [vmem:[#allocation5 + $0x1e8] sm:$0xff]
    %v177 = vld [vmem:[#allocation5 + $0x1f0] sm:$0xff]
    %v178 = vld [vmem:[#allocation5 + $0x1f8] sm:$0xff]
    %v179 = vld [vmem:[#allocation5 + $0x200] sm:$0xff]
    %v180 = vld [vmem:[#allocation5 + $0x208] sm:$0xff]
    %v181 = vld [vmem:[#allocation5 + $0x210] sm:$0xff]
    %v182 = vld [vmem:[#allocation5 + $0x218] sm:$0xff]
    %v183 = vld [vmem:[#allocation5 + $0x220] sm:$0xff]
    %v184 = vld [vmem:[#allocation5 + $0x228] sm:$0xff]
    %v185 = vld [vmem:[#allocation5 + $0x230] sm:$0xff]
    %v186 = vld [vmem:[#allocation5 + $0x238] sm:$0xff]
    %v187 = vld [vmem:[#allocation5 + $0x240] sm:$0xff]
    %v188 = vld [vmem:[#allocation5 + $0x248] sm:$0xff]
    %v189 = vld [vmem:[#allocation5 + $0x250] sm:$0xff]
    %v190 = vld [vmem:[#allocation5 + $0x258] sm:$0xff]
    %v191 = vld [vmem:[#allocation5 + $0x260] sm:$0xff]
    %v192 = vld [vmem:[#allocation5 + $0x268] sm:$0xff]
    %v193 = vld [vmem:[#allocation5 + $0x270] sm:$0xff]
    %v194 = vld [vmem:[#allocation5 + $0x278] sm:$0xff]
    %v195 = vld [vmem:[#allocation5 + $0x280] sm:$0xff]
    %v196 = vld [vmem:[#allocation5 + $0x288] sm:$0xff]
    %v197 = vld [vmem:[#allocation5 + $0x290] sm:$0xff]
    %v198 = vld [vmem:[#allocation5 + $0x298] sm:$0xff]
    %v199 = vld [vmem:[#allocation5 + $0x2a0] sm:$0xff]
    %v200 = vld [vmem:[#allocation5 + $0x2a8] sm:$0xff]
    %v201 = vld [vmem:[#allocation5 + $0x2b0] sm:$0xff]
    %v202 = vld [vmem:[#allocation5 + $0x2b8] sm:$0xff]
    %v203 = vld [vmem:[#allocation5 + $0x2c0] sm:$0xff]
    %v204 = vld [vmem:[#allocation5 + $0x2c8] sm:$0xff]
    %v205 = vld [vmem:[#allocation5 + $0x2d0] sm:$0xff]
    %v206 = vld [vmem:[#allocation5 + $0x2d8] sm:$0xff]
    %v207 = vld [vmem:[#allocation5 + $0x2e0] sm:$0xff]
    %v208 = vld [vmem:[#allocation5 + $0x2e8] sm:$0xff]
    %v209 = vld [vmem:[#allocation5 + $0x2f0] sm:$0xff]
    %v210 = vld [vmem:[#allocation5 + $0x2f8] sm:$0xff]
    %v211 = vld [vmem:[#allocation5 + $0x300] sm:$0xff]
    %v212 = vld [vmem:[#allocation5 + $0x308] sm:$0xff]
    %v213 = vld [vmem:[#allocation5 + $0x310] sm:$0xff]
    %v214 = vld [vmem:[#allocation5 + $0x318] sm:$0xff]
    %v215 = vld [vmem:[#allocation5 + $0x320] sm:$0xff]
    %v216 = vld [vmem:[#allocation5 + $0x328] sm:$0xff]
    %v217 = vld [vmem:[#allocation5 + $0x330] sm:$0xff]
    %v218 = vld [vmem:[#allocation5 + $0x338] sm:$0xff]
    %v219 = vld [vmem:[#allocation5 + $0x340] sm:$0xff]
    %v220 = vld [vmem:[#allocation5 + $0x348] sm:$0xff]
    %v221 = vld [vmem:[#allocation5 + $0x350] sm:$0xff]
    %v222 = vld [vmem:[#allocation5 + $0x358] sm:$0xff]
    %v223 = vld [vmem:[#allocation5 + $0x360] sm:$0xff]
    %v224 = vld [vmem:[#allocation5 + $0x368] sm:$0xff]
    %v225 = vld [vmem:[#allocation5 + $0x370] sm:$0xff]
    %v226 = vld [vmem:[#allocation5 + $0x378] sm:$0xff]
    %v227 = vld [vmem:[#allocation5 + $0x380] sm:$0xff]
    %v228 = vld [vmem:[#allocation5 + $0x388] sm:$0xff]
    %v229 = vld [vmem:[#allocation5 + $0x390] sm:$0xff]
    %v230 = vld [vmem:[#allocation5 + $0x398] sm:$0xff]
    %v231 = vld [vmem:[#allocation5 + $0x3a0] sm:$0xff]
    %v232 = vld [vmem:[#allocation5 + $0x3a8] sm:$0xff]
    %v233 = vld [vmem:[#allocation5 + $0x3b0] sm:$0xff]
    %v234 = vld [vmem:[#allocation5 + $0x3b8] sm:$0xff]
    %v235 = vld [vmem:[#allocation5 + $0x3c0] sm:$0xff]
    %v236 = vld [vmem:[#allocation5 + $0x3c8] sm:$0xff]
    %v237 = vld [vmem:[#allocation5 + $0x3d0] sm:$0xff]
    %v238 = vld [vmem:[#allocation5 + $0x3d8] sm:$0xff]
    %v239 = vld [vmem:[#allocation5 + $0x3e0] sm:$0xff]
    %v240 = vld [vmem:[#allocation5 + $0x3e8] sm:$0xff]
    %v241 = vld [vmem:[#allocation5 + $0x3f0] sm:$0xff]
    %v242 = vld [vmem:[#allocation5 + $0x3f8] sm:$0xff]
    %v243 = vld [vmem:[#allocation5 + $0x400] sm:$0xff]
    %v244 = vld [vmem:[#allocation5 + $0x408] sm:$0xff]
    %v245 = vld [vmem:[#allocation5 + $0x410] sm:$0xff]
    %v246 = vld [vmem:[#allocation5 + $0x418] sm:$0xff]
    %v247 = vld [vmem:[#allocation5 + $0x420] sm:$0xff]
    %v248 = vld [vmem:[#allocation5 + $0x428] sm:$0xff]
    %v249 = vld [vmem:[#allocation5 + $0x430] sm:$0xff]
    %v250 = vld [vmem:[#allocation5 + $0x438] sm:$0xff]
    %v251 = vld [vmem:[#allocation5 + $0x440] sm:$0xff]
    %v252 = vld [vmem:[#allocation5 + $0x448] sm:$0xff]
    %v253 = vld [vmem:[#allocation5 + $0x450] sm:$0xff]
    %v254 = vld [vmem:[#allocation5 + $0x458] sm:$0xff]
    %v255 = vld [vmem:[#allocation5 + $0x460] sm:$0xff]
    %v256 = vld [vmem:[#allocation5 + $0x468] sm:$0xff]
    %v257 = vld [vmem:[#allocation5 + $0x470] sm:$0xff]
    %v258 = vld [vmem:[#allocation5 + $0x478] sm:$0xff]
    %v259 = vld [vmem:[#allocation5 + $0x480] sm:$0xff]
    %v260 = vld [vmem:[#allocation5 + $0x488] sm:$0xff]
    %v261 = vld [vmem:[#allocation5 + $0x490] sm:$0xff]
    %v262 = vld [vmem:[#allocation5 + $0x498] sm:$0xff]
    %v263 = vld [vmem:[#allocation5 + $0x4a0] sm:$0xff]
    %v264 = vld [vmem:[#allocation5 + $0x4a8] sm:$0xff]
    %v265 = vld [vmem:[#allocation5 + $0x4b0] sm:$0xff]
    %v266 = vld [vmem:[#allocation5 + $0x4b8] sm:$0xff]
    %v267 = vld [vmem:[#allocation5 + $0x4c0] sm:$0xff]
    %v268 = vld [vmem:[#allocation5 + $0x4c8] sm:$0xff]
    %v269 = vld [vmem:[#allocation5 + $0x4d0] sm:$0xff]
    %v270 = vld [vmem:[#allocation5 + $0x4d8] sm:$0xff]
    %v271 = vld [vmem:[#allocation5 + $0x4e0] sm:$0xff]
    %v272 = vld [vmem:[#allocation5 + $0x4e8] sm:$0xff]
    %v273 = vld [vmem:[#allocation5 + $0x4f0] sm:$0xff]
    %v274 = vld [vmem:[#allocation5 + $0x4f8] sm:$0xff]
    %v275 = vld [vmem:[#allocation5 + $0x500] sm:$0xff]
    %v276 = vld [vmem:[#allocation5 + $0x508] sm:$0xff]
    %v277 = vld [vmem:[#allocation5 + $0x510] sm:$0xff]
    %v278 = vld [vmem:[#allocation5 + $0x518] sm:$0xff]
    %v279 = vld [vmem:[#allocation5 + $0x520] sm:$0xff]
    %v280 = vld [vmem:[#allocation5 + $0x528] sm:$0xff]
    %v281 = vld [vmem:[#allocation5 + $0x530] sm:$0xff]
    %v282 = vld [vmem:[#allocation5 + $0x538] sm:$0xff]
    %v283 = vld [vmem:[#allocation5 + $0x540] sm:$0xff]
    %v284 = vld [vmem:[#allocation5 + $0x548] sm:$0xff]
    %v285 = vld [vmem:[#allocation5 + $0x550] sm:$0xff]
    %v286 = vld [vmem:[#allocation5 + $0x558] sm:$0xff]
    %v287 = vld [vmem:[#allocation5 + $0x560] sm:$0xff]
    %v288 = vld [vmem:[#allocation5 + $0x568] sm:$0xff]
    %v289 = vld [vmem:[#allocation5 + $0x570] sm:$0xff]
    %v290 = vld [vmem:[#allocation5 + $0x578] sm:$0xff]
    %v291 = vld [vmem:[#allocation5 + $0x580] sm:$0xff]
    %v292 = vld [vmem:[#allocation5 + $0x588] sm:$0xff]
    %v293 = vld [vmem:[#allocation5 + $0x590] sm:$0xff]
    %v294 = vld [vmem:[#allocation5 + $0x598] sm:$0xff]
    %v295 = vld [vmem:[#allocation5 + $0x5a0] sm:$0xff]
    %v296 = vld [vmem:[#allocation5 + $0x5a8] sm:$0xff]
    %v297 = vld [vmem:[#allocation5 + $0x5b0] sm:$0xff]
    %v298 = vld [vmem:[#allocation5 + $0x5b8] sm:$0xff]
    %v299 = vld [vmem:[#allocation5 + $0x5c0] sm:$0xff]
    %v300 = vld [vmem:[#allocation5 + $0x5c8] sm:$0xff]
    %v301 = vld [vmem:[#allocation5 + $0x5d0] sm:$0xff]
    %v302 = vld [vmem:[#allocation5 + $0x5d8] sm:$0xff]
    %v303 = vld [vmem:[#allocation5 + $0x5e0] sm:$0xff]
    %v304 = vld [vmem:[#allocation5 + $0x5e8] sm:$0xff]
    %v305 = vld [vmem:[#allocation5 + $0x5f0] sm:$0xff]
    %v306 = vld [vmem:[#allocation5 + $0x5f8] sm:$0xff]
    %v307 = vld [vmem:[#allocation5 + $0x600] sm:$0xff]
    %v308 = vld [vmem:[#allocation5 + $0x608] sm:$0xff]
    %v309 = vld [vmem:[#allocation5 + $0x610] sm:$0xff]
    %v310 = vld [vmem:[#allocation5 + $0x618] sm:$0xff]
    %v311 = vld [vmem:[#allocation7] sm:$0xf]
    %v313 = vlaneseq
    %v314 = vshrl.u32 %v313, 7
    %v315 = vsub.s32 0, %v314
    %v316 = vrot.slane %v311, %v315
    %v317 = vlaneseq
    %v318 = vshrl.u32 %v317, 7
    %v319 = vsub.s32 1, %v318
    %v320 = vrot.slane %v311, %v319
    %v321 = vlaneseq
    %v322 = vshrl.u32 %v321, 7
    %v323 = vsub.s32 2, %v322
    %v324 = vrot.slane %v311, %v323
    %v325 = vlaneseq
    %v326 = vshrl.u32 %v325, 7
    %v327 = vsub.s32 3, %v326
    %v328 = vrot.slane %v311, %v327
    %v529 = vunpack.c.l.b16 %v115
    %v530 = vunpack.c.h.b16 %v115
    %v531 = vunpack.c.l.b16 %v116
    %v532 = vunpack.c.h.b16 %v116
    %v533 = vunpack.c.l.b16 %v117
    %v534 = vunpack.c.h.b16 %v117
    %v535 = vunpack.c.l.b16 %v118
    %v536 = vunpack.c.h.b16 %v118
    %v537 = vunpack.c.l.b16 %v119
    %v538 = vunpack.c.h.b16 %v119
    %v539 = vunpack.c.l.b16 %v120
    %v540 = vunpack.c.h.b16 %v120
    %v541 = vunpack.c.l.b16 %v121
    %v542 = vunpack.c.h.b16 %v121
    %v543 = vunpack.c.l.b16 %v122
    %v544 = vunpack.c.h.b16 %v122
    %v545 = vunpack.c.l.b16 %v123
    %v546 = vunpack.c.h.b16 %v123
    %v547 = vunpack.c.l.b16 %v124
    %v548 = vunpack.c.h.b16 %v124
    %v549 = vunpack.c.l.b16 %v125
    %v550 = vunpack.c.h.b16 %v125
    %v551 = vunpack.c.l.b16 %v126
    %v552 = vunpack.c.h.b16 %v126
    %v553 = vunpack.c.l.b16 %v127
    %v554 = vunpack.c.h.b16 %v127
    %v555 = vunpack.c.l.b16 %v128
    %v556 = vunpack.c.h.b16 %v128
    %v557 = vunpack.c.l.b16 %v129
    %v558 = vunpack.c.h.b16 %v129
    %v559 = vunpack.c.l.b16 %v130
    %v560 = vunpack.c.h.b16 %v130
    %v561 = vunpack.c.l.b16 %v131
    %v562 = vunpack.c.h.b16 %v131
    %v563 = vunpack.c.l.b16 %v132
    %v564 = vunpack.c.h.b16 %v132
    %v565 = vunpack.c.l.b16 %v133
    %v566 = vunpack.c.h.b16 %v133
    %v567 = vunpack.c.l.b16 %v134
    %v568 = vunpack.c.h.b16 %v134
    %v569 = vunpack.c.l.b16 %v135
    %v570 = vunpack.c.h.b16 %v135
    %v571 = vunpack.c.l.b16 %v136
    %v572 = vunpack.c.h.b16 %v136
    %v573 = vunpack.c.l.b16 %v137
    %v574 = vunpack.c.h.b16 %v137
    %v575 = vunpack.c.l.b16 %v138
    %v576 = vunpack.c.h.b16 %v138
    %v577 = vunpack.c.l.b16 %v139
    %v578 = vunpack.c.h.b16 %v139
    %v579 = vunpack.c.l.b16 %v140
    %v580 = vunpack.c.h.b16 %v140
    %v581 = vunpack.c.l.b16 %v141
    %v582 = vunpack.c.h.b16 %v141
    %v583 = vunpack.c.l.b16 %v142
    %v584 = vunpack.c.h.b16 %v142
    %v585 = vunpack.c.l.b16 %v143
    %v586 = vunpack.c.h.b16 %v143
    %v587 = vunpack.c.l.b16 %v144
    %v588 = vunpack.c.h.b16 %v144
    %v589 = vunpack.c.l.b16 %v145
    %v590 = vunpack.c.h.b16 %v145
    %v591 = vunpack.c.l.b16 %v146
    %v592 = vunpack.c.h.b16 %v146
    %v593 = vunpack.c.l.b16 %v147
    %v594 = vunpack.c.h.b16 %v147
    %v595 = vunpack.c.l.b16 %v148
    %v596 = vunpack.c.h.b16 %v148
    %v597 = vunpack.c.l.b16 %v149
    %v598 = vunpack.c.h.b16 %v149
    %v599 = vunpack.c.l.b16 %v150
    %v600 = vunpack.c.h.b16 %v150
    %v601 = vunpack.c.l.b16 %v151
    %v602 = vunpack.c.h.b16 %v151
    %v603 = vunpack.c.l.b16 %v152
    %v604 = vunpack.c.h.b16 %v152
    %v605 = vunpack.c.l.b16 %v153
    %v606 = vunpack.c.h.b16 %v153
    %v607 = vunpack.c.l.b16 %v154
    %v608 = vunpack.c.h.b16 %v154
    %v609 = vunpack.c.l.b16 %v155
    %v610 = vunpack.c.h.b16 %v155
    %v611 = vunpack.c.l.b16 %v156
    %v612 = vunpack.c.h.b16 %v156
    %v613 = vunpack.c.l.b16 %v157
    %v614 = vunpack.c.h.b16 %v157
    %v615 = vunpack.c.l.b16 %v158
    %v616 = vunpack.c.h.b16 %v158
    %v617 = vunpack.c.l.b16 %v159
    %v618 = vunpack.c.h.b16 %v159
    %v619 = vunpack.c.l.b16 %v160
    %v620 = vunpack.c.h.b16 %v160
    %v621 = vunpack.c.l.b16 %v161
    %v622 = vunpack.c.h.b16 %v161
    %v623 = vunpack.c.l.b16 %v162
    %v624 = vunpack.c.h.b16 %v162
    %v625 = vunpack.c.l.b16 %v163
    %v626 = vunpack.c.h.b16 %v163
    %v627 = vunpack.c.l.b16 %v164
    %v628 = vunpack.c.h.b16 %v164
    %v629 = vunpack.c.l.b16 %v165
    %v630 = vunpack.c.h.b16 %v165
    %v631 = vunpack.c.l.b16 %v166
    %v632 = vunpack.c.h.b16 %v166
    %v633 = vunpack.c.l.b16 %v167
    %v634 = vunpack.c.h.b16 %v167
    %v635 = vunpack.c.l.b16 %v168
    %v636 = vunpack.c.h.b16 %v168
    %v637 = vunpack.c.l.b16 %v169
    %v638 = vunpack.c.h.b16 %v169
    %v639 = vunpack.c.l.b16 %v170
    %v640 = vunpack.c.h.b16 %v170
    %v641 = vunpack.c.l.b16 %v171
    %v642 = vunpack.c.h.b16 %v171
    %v643 = vunpack.c.l.b16 %v172
    %v644 = vunpack.c.h.b16 %v172
    %v645 = vunpack.c.l.b16 %v173
    %v646 = vunpack.c.h.b16 %v173
    %v647 = vunpack.c.l.b16 %v174
    %v648 = vunpack.c.h.b16 %v174
    %v649 = vunpack.c.l.b16 %v175
    %v650 = vunpack.c.h.b16 %v175
    %v651 = vunpack.c.l.b16 %v176
    %v652 = vunpack.c.h.b16 %v176
    %v653 = vunpack.c.l.b16 %v177
    %v654 = vunpack.c.h.b16 %v177
    %v655 = vunpack.c.l.b16 %v178
    %v656 = vunpack.c.h.b16 %v178
    %v657 = vunpack.c.l.b16 %v179
    %v658 = vunpack.c.h.b16 %v179
    %v659 = vunpack.c.l.b16 %v180
    %v660 = vunpack.c.h.b16 %v180
    %v661 = vunpack.c.l.b16 %v181
    %v662 = vunpack.c.h.b16 %v181
    %v663 = vunpack.c.l.b16 %v182
    %v664 = vunpack.c.h.b16 %v182
    %v665 = vunpack.c.l.b16 %v183
    %v666 = vunpack.c.h.b16 %v183
    %v667 = vunpack.c.l.b16 %v184
    %v668 = vunpack.c.h.b16 %v184
    %v669 = vunpack.c.l.b16 %v185
    %v670 = vunpack.c.h.b16 %v185
    %v671 = vunpack.c.l.b16 %v186
    %v672 = vunpack.c.h.b16 %v186
    %v673 = vunpack.c.l.b16 %v187
    %v674 = vunpack.c.h.b16 %v187
    %v675 = vunpack.c.l.b16 %v188
    %v676 = vunpack.c.h.b16 %v188
    %v677 = vunpack.c.l.b16 %v189
    %v678 = vunpack.c.h.b16 %v189
    %v679 = vunpack.c.l.b16 %v190
    %v680 = vunpack.c.h.b16 %v190
    %v681 = vunpack.c.l.b16 %v191
    %v682 = vunpack.c.h.b16 %v191
    %v683 = vunpack.c.l.b16 %v192
    %v684 = vunpack.c.h.b16 %v192
    %v685 = vunpack.c.l.b16 %v193
    %v686 = vunpack.c.h.b16 %v193
    %v687 = vunpack.c.l.b16 %v194
    %v688 = vunpack.c.h.b16 %v194
    %v689 = vunpack.c.l.b16 %v195
    %v690 = vunpack.c.h.b16 %v195
    %v691 = vunpack.c.l.b16 %v196
    %v692 = vunpack.c.h.b16 %v196
    %v693 = vunpack.c.l.b16 %v197
    %v694 = vunpack.c.h.b16 %v197
    %v695 = vunpack.c.l.b16 %v198
    %v696 = vunpack.c.h.b16 %v198
    %v697 = vunpack.c.l.b16 %v199
    %v698 = vunpack.c.h.b16 %v199
    %v699 = vunpack.c.l.b16 %v200
    %v700 = vunpack.c.h.b16 %v200
    %v701 = vunpack.c.l.b16 %v201
    %v702 = vunpack.c.h.b16 %v201
    %v703 = vunpack.c.l.b16 %v202
    %v704 = vunpack.c.h.b16 %v202
    %v705 = vunpack.c.l.b16 %v203
    %v706 = vunpack.c.h.b16 %v203
    %v707 = vunpack.c.l.b16 %v204
    %v708 = vunpack.c.h.b16 %v204
    %v709 = vunpack.c.l.b16 %v205
    %v710 = vunpack.c.h.b16 %v205
    %v711 = vunpack.c.l.b16 %v206
    %v712 = vunpack.c.h.b16 %v206
    %v713 = vunpack.c.l.b16 %v207
    %v714 = vunpack.c.h.b16 %v207
    %v715 = vunpack.c.l.b16 %v208
    %v716 = vunpack.c.h.b16 %v208
    %v717 = vunpack.c.l.b16 %v209
    %v718 = vunpack.c.h.b16 %v209
    %v719 = vunpack.c.l.b16 %v210
    %v720 = vunpack.c.h.b16 %v210
    %v721 = vunpack.c.l.b16 %v211
    %v722 = vunpack.c.h.b16 %v211
    %v723 = vunpack.c.l.b16 %v212
    %v724 = vunpack.c.h.b16 %v212
    %v725 = vunpack.c.l.b16 %v213
    %v726 = vunpack.c.h.b16 %v213
    %v727 = vunpack.c.l.b16 %v214
    %v728 = vunpack.c.h.b16 %v214
    %v729 = vunpack.c.l.b16 %v215
    %v730 = vunpack.c.h.b16 %v215
    %v731 = vunpack.c.l.b16 %v216
    %v732 = vunpack.c.h.b16 %v216
    %v733 = vunpack.c.l.b16 %v217
    %v734 = vunpack.c.h.b16 %v217
    %v735 = vunpack.c.l.b16 %v218
    %v736 = vunpack.c.h.b16 %v218
    %v737 = vunpack.c.l.b16 %v219
    %v738 = vunpack.c.h.b16 %v219
    %v739 = vunpack.c.l.b16 %v220
    %v740 = vunpack.c.h.b16 %v220
    %v741 = vunpack.c.l.b16 %v221
    %v742 = vunpack.c.h.b16 %v221
    %v743 = vunpack.c.l.b16 %v222
    %v744 = vunpack.c.h.b16 %v222
    %v745 = vunpack.c.l.b16 %v223
    %v746 = vunpack.c.h.b16 %v223
    %v747 = vunpack.c.l.b16 %v224
    %v748 = vunpack.c.h.b16 %v224
    %v749 = vunpack.c.l.b16 %v225
    %v750 = vunpack.c.h.b16 %v225
    %v751 = vunpack.c.l.b16 %v226
    %v752 = vunpack.c.h.b16 %v226
    %v753 = vunpack.c.l.b16 %v227
    %v754 = vunpack.c.h.b16 %v227
    %v755 = vunpack.c.l.b16 %v228
    %v756 = vunpack.c.h.b16 %v228
    %v757 = vunpack.c.l.b16 %v229
    %v758 = vunpack.c.h.b16 %v229
    %v759 = vunpack.c.l.b16 %v230
    %v760 = vunpack.c.h.b16 %v230
    %v761 = vunpack.c.l.b16 %v231
    %v762 = vunpack.c.h.b16 %v231
    %v763 = vunpack.c.l.b16 %v232
    %v764 = vunpack.c.h.b16 %v232
    %v765 = vunpack.c.l.b16 %v233
    %v766 = vunpack.c.h.b16 %v233
    %v767 = vunpack.c.l.b16 %v234
    %v768 = vunpack.c.h.b16 %v234
    %v769 = vunpack.c.l.b16 %v235
    %v770 = vunpack.c.h.b16 %v235
    %v771 = vunpack.c.l.b16 %v236
    %v772 = vunpack.c.h.b16 %v236
    %v773 = vunpack.c.l.b16 %v237
    %v774 = vunpack.c.h.b16 %v237
    %v775 = vunpack.c.l.b16 %v238
    %v776 = vunpack.c.h.b16 %v238
    %v777 = vunpack.c.l.b16 %v239
    %v778 = vunpack.c.h.b16 %v239
    %v779 = vunpack.c.l.b16 %v240
    %v780 = vunpack.c.h.b16 %v240
    %v781 = vunpack.c.l.b16 %v241
    %v782 = vunpack.c.h.b16 %v241
    %v783 = vunpack.c.l.b16 %v242
    %v784 = vunpack.c.h.b16 %v242
    %v785 = vunpack.c.l.b16 %v243
    %v786 = vunpack.c.h.b16 %v243
    %v787 = vunpack.c.l.b16 %v244
    %v788 = vunpack.c.h.b16 %v244
    %v789 = vunpack.c.l.b16 %v245
    %v790 = vunpack.c.h.b16 %v245
    %v791 = vunpack.c.l.b16 %v246
    %v792 = vunpack.c.h.b16 %v246
    %v793 = vunpack.c.l.b16 %v247
    %v794 = vunpack.c.h.b16 %v247
    %v795 = vunpack.c.l.b16 %v248
    %v796 = vunpack.c.h.b16 %v248
    %v797 = vunpack.c.l.b16 %v249
    %v798 = vunpack.c.h.b16 %v249
    %v799 = vunpack.c.l.b16 %v250
    %v800 = vunpack.c.h.b16 %v250
    %v801 = vunpack.c.l.b16 %v251
    %v802 = vunpack.c.h.b16 %v251
    %v803 = vunpack.c.l.b16 %v252
    %v804 = vunpack.c.h.b16 %v252
    %v805 = vunpack.c.l.b16 %v253
    %v806 = vunpack.c.h.b16 %v253
    %v807 = vunpack.c.l.b16 %v254
    %v808 = vunpack.c.h.b16 %v254
    %v809 = vunpack.c.l.b16 %v255
    %v810 = vunpack.c.h.b16 %v255
    %v811 = vunpack.c.l.b16 %v256
    %v812 = vunpack.c.h.b16 %v256
    %v813 = vunpack.c.l.b16 %v257
    %v814 = vunpack.c.h.b16 %v257
    %v815 = vunpack.c.l.b16 %v258
    %v816 = vunpack.c.h.b16 %v258
    %v817 = vunpack.c.l.b16 %v259
    %v818 = vunpack.c.h.b16 %v259
    %v819 = vunpack.c.l.b16 %v260
    %v820 = vunpack.c.h.b16 %v260
    %v821 = vunpack.c.l.b16 %v261
    %v822 = vunpack.c.h.b16 %v261
    %v823 = vunpack.c.l.b16 %v262
    %v824 = vunpack.c.h.b16 %v262
    %v825 = vunpack.c.l.b16 %v263
    %v826 = vunpack.c.h.b16 %v263
    %v827 = vunpack.c.l.b16 %v264
    %v828 = vunpack.c.h.b16 %v264
    %v829 = vunpack.c.l.b16 %v265
    %v830 = vunpack.c.h.b16 %v265
    %v831 = vunpack.c.l.b16 %v266
    %v832 = vunpack.c.h.b16 %v266
    %v833 = vunpack.c.l.b16 %v267
    %v834 = vunpack.c.h.b16 %v267
    %v835 = vunpack.c.l.b16 %v268
    %v836 = vunpack.c.h.b16 %v268
    %v837 = vunpack.c.l.b16 %v269
    %v838 = vunpack.c.h.b16 %v269
    %v839 = vunpack.c.l.b16 %v270
    %v840 = vunpack.c.h.b16 %v270
    %v841 = vunpack.c.l.b16 %v271
    %v842 = vunpack.c.h.b16 %v271
    %v843 = vunpack.c.l.b16 %v272
    %v844 = vunpack.c.h.b16 %v272
    %v845 = vunpack.c.l.b16 %v273
    %v846 = vunpack.c.h.b16 %v273
    %v847 = vunpack.c.l.b16 %v274
    %v848 = vunpack.c.h.b16 %v274
    %v849 = vunpack.c.l.b16 %v275
    %v850 = vunpack.c.h.b16 %v275
    %v851 = vunpack.c.l.b16 %v276
    %v852 = vunpack.c.h.b16 %v276
    %v853 = vunpack.c.l.b16 %v277
    %v854 = vunpack.c.h.b16 %v277
    %v855 = vunpack.c.l.b16 %v278
    %v856 = vunpack.c.h.b16 %v278
    %v857 = vunpack.c.l.b16 %v279
    %v858 = vunpack.c.h.b16 %v279
    %v859 = vunpack.c.l.b16 %v280
    %v860 = vunpack.c.h.b16 %v280
    %v861 = vunpack.c.l.b16 %v281
    %v862 = vunpack.c.h.b16 %v281
    %v863 = vunpack.c.l.b16 %v282
    %v864 = vunpack.c.h.b16 %v282
    %v865 = vunpack.c.l.b16 %v283
    %v866 = vunpack.c.h.b16 %v283
    %v867 = vunpack.c.l.b16 %v284
    %v868 = vunpack.c.h.b16 %v284
    %v869 = vunpack.c.l.b16 %v285
    %v870 = vunpack.c.h.b16 %v285
    %v871 = vunpack.c.l.b16 %v286
    %v872 = vunpack.c.h.b16 %v286
    %v873 = vunpack.c.l.b16 %v287
    %v874 = vunpack.c.h.b16 %v287
    %v875 = vunpack.c.l.b16 %v288
    %v876 = vunpack.c.h.b16 %v288
    %v877 = vunpack.c.l.b16 %v289
    %v878 = vunpack.c.h.b16 %v289
    %v879 = vunpack.c.l.b16 %v290
    %v880 = vunpack.c.h.b16 %v290
    %v881 = vunpack.c.l.b16 %v291
    %v882 = vunpack.c.h.b16 %v291
    %v883 = vunpack.c.l.b16 %v292
    %v884 = vunpack.c.h.b16 %v292
    %v885 = vunpack.c.l.b16 %v293
    %v886 = vunpack.c.h.b16 %v293
    %v887 = vunpack.c.l.b16 %v294
    %v888 = vunpack.c.h.b16 %v294
    %v889 = vunpack.c.l.b16 %v295
    %v890 = vunpack.c.h.b16 %v295
    %v891 = vunpack.c.l.b16 %v296
    %v892 = vunpack.c.h.b16 %v296
    %v893 = vunpack.c.l.b16 %v297
    %v894 = vunpack.c.h.b16 %v297
    %v895 = vunpack.c.l.b16 %v298
    %v896 = vunpack.c.h.b16 %v298
    %v897 = vunpack.c.l.b16 %v299
    %v898 = vunpack.c.h.b16 %v299
    %v899 = vunpack.c.l.b16 %v300
    %v900 = vunpack.c.h.b16 %v300
    %v901 = vunpack.c.l.b16 %v301
    %v902 = vunpack.c.h.b16 %v301
    %v903 = vunpack.c.l.b16 %v302
    %v904 = vunpack.c.h.b16 %v302
    %v905 = vunpack.c.l.b16 %v303
    %v906 = vunpack.c.h.b16 %v303
    %v907 = vunpack.c.l.b16 %v304
    %v908 = vunpack.c.h.b16 %v304
    %v909 = vunpack.c.l.b16 %v305
    %v910 = vunpack.c.h.b16 %v305
    %v911 = vunpack.c.l.b16 %v306
    %v912 = vunpack.c.h.b16 %v306
    %v913 = vunpack.c.l.b16 %v307
    %v914 = vunpack.c.h.b16 %v307
    %v915 = vunpack.c.l.b16 %v308
    %v916 = vunpack.c.h.b16 %v308
    %v917 = vunpack.c.l.b16 %v309
    %v918 = vunpack.c.h.b16 %v309
    %v919 = vunpack.c.l.b16 %v310
    %v920 = vunpack.c.h.b16 %v310
    %v921 = vpack.c.b16 %v533, %v529
    %v922 = vpack.c.b16 %v534, %v530
    %v923 = vpack.c.b16 %v535, %v531
    %v924 = vpack.c.b16 %v536, %v532
    %v925 = vpack.c.b16 %v541, %v537
    %v926 = vpack.c.b16 %v542, %v538
    %v927 = vpack.c.b16 %v543, %v539
    %v928 = vpack.c.b16 %v544, %v540
    %v929 = vpack.c.b16 %v549, %v545
    %v930 = vpack.c.b16 %v550, %v546
    %v931 = vpack.c.b16 %v551, %v547
    %v932 = vpack.c.b16 %v552, %v548
    %v933 = vpack.c.b16 %v557, %v553
    %v934 = vpack.c.b16 %v558, %v554
    %v935 = vpack.c.b16 %v559, %v555
    %v936 = vpack.c.b16 %v560, %v556
    %v937 = vpack.c.b16 %v565, %v561
    %v938 = vpack.c.b16 %v566, %v562
    %v939 = vpack.c.b16 %v567, %v563
    %v940 = vpack.c.b16 %v568, %v564
    %v941 = vpack.c.b16 %v573, %v569
    %v942 = vpack.c.b16 %v574, %v570
    %v943 = vpack.c.b16 %v575, %v571
    %v944 = vpack.c.b16 %v576, %v572
    %v945 = vpack.c.b16 %v581, %v577
    %v946 = vpack.c.b16 %v582, %v578
    %v947 = vpack.c.b16 %v583, %v579
    %v948 = vpack.c.b16 %v584, %v580
    %v949 = vpack.c.b16 %v589, %v585
    %v950 = vpack.c.b16 %v590, %v586
    %v951 = vpack.c.b16 %v591, %v587
    %v952 = vpack.c.b16 %v592, %v588
    %v953 = vpack.c.b16 %v597, %v593
    %v954 = vpack.c.b16 %v598, %v594
    %v955 = vpack.c.b16 %v599, %v595
    %v956 = vpack.c.b16 %v600, %v596
    %v957 = vpack.c.b16 %v605, %v601
    %v958 = vpack.c.b16 %v606, %v602
    %v959 = vpack.c.b16 %v607, %v603
    %v960 = vpack.c.b16 %v608, %v604
    %v961 = vpack.c.b16 %v613, %v609
    %v962 = vpack.c.b16 %v614, %v610
    %v963 = vpack.c.b16 %v615, %v611
    %v964 = vpack.c.b16 %v616, %v612
    %v965 = vpack.c.b16 %v621, %v617
    %v966 = vpack.c.b16 %v622, %v618
    %v967 = vpack.c.b16 %v623, %v619
    %v968 = vpack.c.b16 %v624, %v620
    %v969 = vpack.c.b16 %v629, %v625
    %v970 = vpack.c.b16 %v630, %v626
    %v971 = vpack.c.b16 %v631, %v627
    %v972 = vpack.c.b16 %v632, %v628
    %v973 = vpack.c.b16 %v637, %v633
    %v974 = vpack.c.b16 %v638, %v634
    %v975 = vpack.c.b16 %v639, %v635
    %v976 = vpack.c.b16 %v640, %v636
    %v977 = vpack.c.b16 %v645, %v641
    %v978 = vpack.c.b16 %v646, %v642
    %v979 = vpack.c.b16 %v647, %v643
    %v980 = vpack.c.b16 %v648, %v644
    %v981 = vpack.c.b16 %v653, %v649
    %v982 = vpack.c.b16 %v654, %v650
    %v983 = vpack.c.b16 %v655, %v651
    %v984 = vpack.c.b16 %v656, %v652
    %v985 = vpack.c.b16 %v661, %v657
    %v986 = vpack.c.b16 %v662, %v658
    %v987 = vpack.c.b16 %v663, %v659
    %v988 = vpack.c.b16 %v664, %v660
    %v989 = vpack.c.b16 %v669, %v665
    %v990 = vpack.c.b16 %v670, %v666
    %v991 = vpack.c.b16 %v671, %v667
    %v992 = vpack.c.b16 %v672, %v668
    %v993 = vpack.c.b16 %v677, %v673
    %v994 = vpack.c.b16 %v678, %v674
    %v995 = vpack.c.b16 %v679, %v675
    %v996 = vpack.c.b16 %v680, %v676
    %v997 = vpack.c.b16 %v685, %v681
    %v998 = vpack.c.b16 %v686, %v682
    %v999 = vpack.c.b16 %v687, %v683
    %v1000 = vpack.c.b16 %v688, %v684
    %v1001 = vpack.c.b16 %v693, %v689
    %v1002 = vpack.c.b16 %v694, %v690
    %v1003 = vpack.c.b16 %v695, %v691
    %v1004 = vpack.c.b16 %v696, %v692
    %v1005 = vpack.c.b16 %v701, %v697
    %v1006 = vpack.c.b16 %v702, %v698
    %v1007 = vpack.c.b16 %v703, %v699
    %v1008 = vpack.c.b16 %v704, %v700
    %v1009 = vpack.c.b16 %v709, %v705
    %v1010 = vpack.c.b16 %v710, %v706
    %v1011 = vpack.c.b16 %v711, %v707
    %v1012 = vpack.c.b16 %v712, %v708
    %v1013 = vpack.c.b16 %v717, %v713
    %v1014 = vpack.c.b16 %v718, %v714
    %v1015 = vpack.c.b16 %v719, %v715
    %v1016 = vpack.c.b16 %v720, %v716
    %v1017 = vpack.c.b16 %v725, %v721
    %v1018 = vpack.c.b16 %v726, %v722
    %v1019 = vpack.c.b16 %v727, %v723
    %v1020 = vpack.c.b16 %v728, %v724
    %v1021 = vpack.c.b16 %v733, %v729
    %v1022 = vpack.c.b16 %v734, %v730
    %v1023 = vpack.c.b16 %v735, %v731
    %v1024 = vpack.c.b16 %v736, %v732
    %v1025 = vpack.c.b16 %v741, %v737
    %v1026 = vpack.c.b16 %v742, %v738
    %v1027 = vpack.c.b16 %v743, %v739
    %v1028 = vpack.c.b16 %v744, %v740
    %v1029 = vpack.c.b16 %v749, %v745
    %v1030 = vpack.c.b16 %v750, %v746
    %v1031 = vpack.c.b16 %v751, %v747
    %v1032 = vpack.c.b16 %v752, %v748
    %v1033 = vpack.c.b16 %v757, %v753
    %v1034 = vpack.c.b16 %v758, %v754
    %v1035 = vpack.c.b16 %v759, %v755
    %v1036 = vpack.c.b16 %v760, %v756
    %v1037 = vpack.c.b16 %v765, %v761
    %v1038 = vpack.c.b16 %v766, %v762
    %v1039 = vpack.c.b16 %v767, %v763
    %v1040 = vpack.c.b16 %v768, %v764
    %v1041 = vpack.c.b16 %v773, %v769
    %v1042 = vpack.c.b16 %v774, %v770
    %v1043 = vpack.c.b16 %v775, %v771
    %v1044 = vpack.c.b16 %v776, %v772
    %v1045 = vpack.c.b16 %v781, %v777
    %v1046 = vpack.c.b16 %v782, %v778
    %v1047 = vpack.c.b16 %v783, %v779
    %v1048 = vpack.c.b16 %v784, %v780
    %v1049 = vpack.c.b16 %v789, %v785
    %v1050 = vpack.c.b16 %v790, %v786
    %v1051 = vpack.c.b16 %v791, %v787
    %v1052 = vpack.c.b16 %v792, %v788
    %v1053 = vpack.c.b16 %v797, %v793
    %v1054 = vpack.c.b16 %v798, %v794
    %v1055 = vpack.c.b16 %v799, %v795
    %v1056 = vpack.c.b16 %v800, %v796
    %v1057 = vpack.c.b16 %v805, %v801
    %v1058 = vpack.c.b16 %v806, %v802
    %v1059 = vpack.c.b16 %v807, %v803
    %v1060 = vpack.c.b16 %v808, %v804
    %v1061 = vpack.c.b16 %v813, %v809
    %v1062 = vpack.c.b16 %v814, %v810
    %v1063 = vpack.c.b16 %v815, %v811
    %v1064 = vpack.c.b16 %v816, %v812
    %v1065 = vpack.c.b16 %v821, %v817
    %v1066 = vpack.c.b16 %v822, %v818
    %v1067 = vpack.c.b16 %v823, %v819
    %v1068 = vpack.c.b16 %v824, %v820
    %v1069 = vpack.c.b16 %v829, %v825
    %v1070 = vpack.c.b16 %v830, %v826
    %v1071 = vpack.c.b16 %v831, %v827
    %v1072 = vpack.c.b16 %v832, %v828
    %v1073 = vpack.c.b16 %v837, %v833
    %v1074 = vpack.c.b16 %v838, %v834
    %v1075 = vpack.c.b16 %v839, %v835
    %v1076 = vpack.c.b16 %v840, %v836
    %v1077 = vpack.c.b16 %v845, %v841
    %v1078 = vpack.c.b16 %v846, %v842
    %v1079 = vpack.c.b16 %v847, %v843
    %v1080 = vpack.c.b16 %v848, %v844
    %v1081 = vpack.c.b16 %v853, %v849
    %v1082 = vpack.c.b16 %v854, %v850
    %v1083 = vpack.c.b16 %v855, %v851
    %v1084 = vpack.c.b16 %v856, %v852
    %v1085 = vpack.c.b16 %v861, %v857
    %v1086 = vpack.c.b16 %v862, %v858
    %v1087 = vpack.c.b16 %v863, %v859
    %v1088 = vpack.c.b16 %v864, %v860
    %v1089 = vpack.c.b16 %v869, %v865
    %v1090 = vpack.c.b16 %v870, %v866
    %v1091 = vpack.c.b16 %v871, %v867
    %v1092 = vpack.c.b16 %v872, %v868
    %v1093 = vpack.c.b16 %v877, %v873
    %v1094 = vpack.c.b16 %v878, %v874
    %v1095 = vpack.c.b16 %v879, %v875
    %v1096 = vpack.c.b16 %v880, %v876
    %v1097 = vpack.c.b16 %v885, %v881
    %v1098 = vpack.c.b16 %v886, %v882
    %v1099 = vpack.c.b16 %v887, %v883
    %v1100 = vpack.c.b16 %v888, %v884
    %v1101 = vpack.c.b16 %v893, %v889
    %v1102 = vpack.c.b16 %v894, %v890
    %v1103 = vpack.c.b16 %v895, %v891
    %v1104 = vpack.c.b16 %v896, %v892
    %v1105 = vpack.c.b16 %v901, %v897
    %v1106 = vpack.c.b16 %v902, %v898
    %v1107 = vpack.c.b16 %v903, %v899
    %v1108 = vpack.c.b16 %v904, %v900
    %v1109 = vpack.c.b16 %v909, %v905
    %v1110 = vpack.c.b16 %v910, %v906
    %v1111 = vpack.c.b16 %v911, %v907
    %v1112 = vpack.c.b16 %v912, %v908
    %v1113 = vpack.c.b16 %v917, %v913
    %v1114 = vpack.c.b16 %v918, %v914
    %v1115 = vpack.c.b16 %v919, %v915
    %v1116 = vpack.c.b16 %v920, %v916
    %vm1313 = vcmask 130048
    %v1315 = vsel %vm1313, %v114, 0
    %1317 = vmatprep.subr.bf16.mxu0 %v950
    %1318 = vmatpush1.bf16.msra.mxu0 %v949
    %1319 = vmatprep.subr.bf16.mxu0 %v946
    %1320 = vmatpush1.bf16.msra.mxu0 %v945
    %1321 = vmatprep.subr.bf16.mxu0 %v942
    %1322 = vmatpush1.bf16.msra.mxu0 %v941
    %1323 = vmatprep.subr.bf16.mxu0 %v938
    %1324 = vmatpush1.bf16.msra.mxu0 %v937
    %1325 = vmatprep.subr.bf16.mxu0 %v934
    %1326 = vmatpush1.bf16.msra.mxu0 %v933
    %1327 = vmatprep.subr.bf16.mxu0 %v930
    %1328 = vmatpush1.bf16.msra.mxu0 %v929
    %1329 = vmatprep.subr.bf16.mxu0 %v926
    %1330 = vmatpush1.bf16.msra.mxu0 %v925
    %1331 = vmatprep.subr.bf16.mxu0 %v922
    %1332 = vmatpush1.bf16.msra.mxu0 %v921
    %1333 = vmatprep.subr.bf16.mxu0 %v982
    %1334 = vmatpush2.bf16.msra.mxu0 %v981
    %1335 = vmatprep.subr.bf16.mxu0 %v978
    %1336 = vmatpush2.bf16.msra.mxu0 %v977
    %1337 = vmatprep.subr.bf16.mxu0 %v974
    %1338 = vmatpush2.bf16.msra.mxu0 %v973
    %1339 = vmatprep.subr.bf16.mxu0 %v970
    %1340 = vmatpush2.bf16.msra.mxu0 %v969
    %1341 = vmatprep.subr.bf16.mxu0 %v966
    %1342 = vmatpush2.bf16.msra.mxu0 %v965
    %1343 = vmatprep.subr.bf16.mxu0 %v962
    %1344 = vmatpush2.bf16.msra.mxu0 %v961
    %1345 = vmatprep.subr.bf16.mxu0 %v958
    %1346 = vmatpush2.bf16.msra.mxu0 %v957
    %1347 = vmatprep.subr.bf16.mxu0 %v954
    %1348 = vmatpush2.bf16.msra.mxu0 %v953
    %1349 = vmatprep.mubr.bf16.mxu0 %v109
    %1350 = vmatmul.mubr.bf16.gmra.mxu0 %v108
    %v1351 = vpop.f32.mrf.mxu0
    %v1352 = vadd.f32 %v316, %v1351
    %v1353 = vpop.f32.mrf.mxu0
    %v1354 = vadd.f32 %v320, %v1353
    %v1355 = vpop.f32.mrf.mxu0
    %v1356 = vadd.f32 %v316, %v1355
    %v1357 = vpop.f32.mrf.mxu0
    %v1358 = vadd.f32 %v320, %v1357
    %1359 = vdwg.mxu0
    %1360 = vmatprep.subr.bf16.mxu0 %v1014
    %1361 = vmatpush1.bf16.msra.mxu0 %v1013
    %1362 = vmatprep.subr.bf16.mxu0 %v1010
    %1363 = vmatpush1.bf16.msra.mxu0 %v1009
    %1364 = vmatprep.subr.bf16.mxu0 %v1006
    %1365 = vmatpush1.bf16.msra.mxu0 %v1005
    %1366 = vmatprep.subr.bf16.mxu0 %v1002
    %1367 = vmatpush1.bf16.msra.mxu0 %v1001
    %1368 = vmatprep.subr.bf16.mxu0 %v998
    %1369 = vmatpush1.bf16.msra.mxu0 %v997
    %1370 = vmatprep.subr.bf16.mxu0 %v994
    %1371 = vmatpush1.bf16.msra.mxu0 %v993
    %1372 = vmatprep.subr.bf16.mxu0 %v990
    %1373 = vmatpush1.bf16.msra.mxu0 %v989
    %1374 = vmatprep.subr.bf16.mxu0 %v986
    %1375 = vmatpush1.bf16.msra.mxu0 %v985
    %1376 = vmatprep.subr.bf16.mxu0 %v1046
    %1377 = vmatpush2.bf16.msra.mxu0 %v1045
    %1378 = vmatprep.subr.bf16.mxu0 %v1042
    %1379 = vmatpush2.bf16.msra.mxu0 %v1041
    %1380 = vmatprep.subr.bf16.mxu0 %v1038
    %1381 = vmatpush2.bf16.msra.mxu0 %v1037
    %1382 = vmatprep.subr.bf16.mxu0 %v1034
    %1383 = vmatpush2.bf16.msra.mxu0 %v1033
    %1384 = vmatprep.subr.bf16.mxu0 %v1030
    %1385 = vmatpush2.bf16.msra.mxu0 %v1029
    %1386 = vmatprep.subr.bf16.mxu0 %v1026
    %1387 = vmatpush2.bf16.msra.mxu0 %v1025
    %1388 = vmatprep.subr.bf16.mxu0 %v1022
    %1389 = vmatpush2.bf16.msra.mxu0 %v1021
    %1390 = vmatprep.subr.bf16.mxu0 %v1018
    %1391 = vmatpush2.bf16.msra.mxu0 %v1017
    %1392 = vmatprep.mubr.bf16.mxu0 %v111
    %1393 = vmatmul.mubr.bf16.gmra.mxu0 %v110
    %v1394 = vpop.f32.mrf.mxu0
    %v1395 = vadd.f32 %v1352, %v1394
    %v1396 = vpop.f32.mrf.mxu0
    %v1397 = vadd.f32 %v1354, %v1396
    %v1398 = vpop.f32.mrf.mxu0
    %v1399 = vadd.f32 %v1356, %v1398
    %v1400 = vpop.f32.mrf.mxu0
    %v1401 = vadd.f32 %v1358, %v1400
    %1402 = vdwg.mxu0
    %1403 = vmatprep.subr.bf16.mxu0 %v1078
    %1404 = vmatpush1.bf16.msra.mxu0 %v1077
    %1405 = vmatprep.subr.bf16.mxu0 %v1074
    %1406 = vmatpush1.bf16.msra.mxu0 %v1073
    %1407 = vmatprep.subr.bf16.mxu0 %v1070
    %1408 = vmatpush1.bf16.msra.mxu0 %v1069
    %1409 = vmatprep.subr.bf16.mxu0 %v1066
    %1410 = vmatpush1.bf16.msra.mxu0 %v1065
    %1411 = vmatprep.subr.bf16.mxu0 %v1062
    %1412 = vmatpush1.bf16.msra.mxu0 %v1061
    %1413 = vmatprep.subr.bf16.mxu0 %v1058
    %1414 = vmatpush1.bf16.msra.mxu0 %v1057
    %1415 = vmatprep.subr.bf16.mxu0 %v1054
    %1416 = vmatpush1.bf16.msra.mxu0 %v1053
    %1417 = vmatprep.subr.bf16.mxu0 %v1050
    %1418 = vmatpush1.bf16.msra.mxu0 %v1049
    %1419 = vmatprep.subr.bf16.mxu0 %v1110
    %1420 = vmatpush2.bf16.msra.mxu0 %v1109
    %1421 = vmatprep.subr.bf16.mxu0 %v1106
    %1422 = vmatpush2.bf16.msra.mxu0 %v1105
    %1423 = vmatprep.subr.bf16.mxu0 %v1102
    %1424 = vmatpush2.bf16.msra.mxu0 %v1101
    %1425 = vmatprep.subr.bf16.mxu0 %v1098
    %1426 = vmatpush2.bf16.msra.mxu0 %v1097
    %1427 = vmatprep.subr.bf16.mxu0 %v1094
    %1428 = vmatpush2.bf16.msra.mxu0 %v1093
    %1429 = vmatprep.subr.bf16.mxu0 %v1090
    %1430 = vmatpush2.bf16.msra.mxu0 %v1089
    %1431 = vmatprep.subr.bf16.mxu0 %v1086
    %1432 = vmatpush2.bf16.msra.mxu0 %v1085
    %1433 = vmatprep.subr.bf16.mxu0 %v1082
    %1434 = vmatpush2.bf16.msra.mxu0 %v1081
    %1435 = vmatprep.mubr.bf16.mxu0 %v113
    %1436 = vmatmul.mubr.bf16.gmra.mxu0 %v112
    %v1437 = vpop.f32.mrf.mxu0
    %v1438 = vadd.f32 %v1395, %v1437
    %v1439 = vpop.f32.mrf.mxu0
    %v1440 = vadd.f32 %v1397, %v1439
    %v1441 = vpop.f32.mrf.mxu0
    %v1442 = vadd.f32 %v1399, %v1441
    %v1443 = vpop.f32.mrf.mxu0
    %v1444 = vadd.f32 %v1401, %v1443
    %1445 = vdwg.mxu0
    %1446 = vmatprep.subr.bf16.mxu0 0
    %1447 = vmatpush1.bf16.msra.mxu0 0
    %1448 = vmatprep.subr.bf16.mxu0 0
    %1449 = vmatpush1.bf16.msra.mxu0 0
    %1450 = vmatprep.subr.bf16.mxu0 0
    %1451 = vmatpush1.bf16.msra.mxu0 0
    %1452 = vmatprep.subr.bf16.mxu0 0
    %1453 = vmatpush1.bf16.msra.mxu0 0
    %1454 = vmatprep.subr.bf16.mxu0 0
    %1455 = vmatpush1.bf16.msra.mxu0 0
    %1456 = vmatprep.subr.bf16.mxu0 0
    %1457 = vmatpush1.bf16.msra.mxu0 0
    %1458 = vmatprep.subr.bf16.mxu0 0
    %1459 = vmatpush1.bf16.msra.mxu0 0
    %1460 = vmatprep.subr.bf16.mxu0 %v1114
    %1461 = vmatpush1.bf16.msra.mxu0 %v1113
    %1462 = vmatprep.subr.bf16.mxu0 0
    %1463 = vmatpush2.bf16.msra.mxu0 0
    %1464 = vmatprep.subr.bf16.mxu0 0
    %1465 = vmatpush2.bf16.msra.mxu0 0
    %1466 = vmatprep.subr.bf16.mxu0 0
    %1467 = vmatpush2.bf16.msra.mxu0 0
    %1468 = vmatprep.subr.bf16.mxu0 0
    %1469 = vmatpush2.bf16.msra.mxu0 0
    %1470 = vmatprep.subr.bf16.mxu0 0
    %1471 = vmatpush2.bf16.msra.mxu0 0
    %1472 = vmatprep.subr.bf16.mxu0 0
    %1473 = vmatpush2.bf16.msra.mxu0 0
    %1474 = vmatprep.subr.bf16.mxu0 0
    %1475 = vmatpush2.bf16.msra.mxu0 0
    %1476 = vmatprep.subr.bf16.mxu0 0
    %1477 = vmatpush2.bf16.msra.mxu0 0
    %1478 = vmatprep.mubr.bf16.mxu0 0
    %1479 = vmatmul.mubr.bf16.gmra.mxu0 %v1315
    %v1480 = vpop.f32.mrf.mxu0
    %v1481 = vadd.f32 %v1438, %v1480
    %v1482 = vpop.f32.mrf.mxu0
    %v1483 = vadd.f32 %v1440, %v1482
    %v1484 = vpop.f32.mrf.mxu0
    %v1485 = vadd.f32 %v1442, %v1484
    %v1486 = vpop.f32.mrf.mxu0
    %v1487 = vadd.f32 %v1444, %v1486
    %1488 = vdwg.mxu0
    %1489 = vmatprep.subr.bf16.mxu0 %v952
    %1490 = vmatpush1.bf16.msra.mxu0 %v951
    %1491 = vmatprep.subr.bf16.mxu0 %v948
    %1492 = vmatpush1.bf16.msra.mxu0 %v947
    %1493 = vmatprep.subr.bf16.mxu0 %v944
    %1494 = vmatpush1.bf16.msra.mxu0 %v943
    %1495 = vmatprep.subr.bf16.mxu0 %v940
    %1496 = vmatpush1.bf16.msra.mxu0 %v939
    %1497 = vmatprep.subr.bf16.mxu0 %v936
    %1498 = vmatpush1.bf16.msra.mxu0 %v935
    %1499 = vmatprep.subr.bf16.mxu0 %v932
    %1500 = vmatpush1.bf16.msra.mxu0 %v931
    %1501 = vmatprep.subr.bf16.mxu0 %v928
    %1502 = vmatpush1.bf16.msra.mxu0 %v927
    %1503 = vmatprep.subr.bf16.mxu0 %v924
    %1504 = vmatpush1.bf16.msra.mxu0 %v923
    %1505 = vmatprep.subr.bf16.mxu0 %v984
    %1506 = vmatpush2.bf16.msra.mxu0 %v983
    %1507 = vmatprep.subr.bf16.mxu0 %v980
    %1508 = vmatpush2.bf16.msra.mxu0 %v979
    %1509 = vmatprep.subr.bf16.mxu0 %v976
    %1510 = vmatpush2.bf16.msra.mxu0 %v975
    %1511 = vmatprep.subr.bf16.mxu0 %v972
    %1512 = vmatpush2.bf16.msra.mxu0 %v971
    %1513 = vmatprep.subr.bf16.mxu0 %v968
    %1514 = vmatpush2.bf16.msra.mxu0 %v967
    %1515 = vmatprep.subr.bf16.mxu0 %v964
    %1516 = vmatpush2.bf16.msra.mxu0 %v963
    %1517 = vmatprep.subr.bf16.mxu0 %v960
    %1518 = vmatpush2.bf16.msra.mxu0 %v959
    %1519 = vmatprep.subr.bf16.mxu0 %v956
    %1520 = vmatpush2.bf16.msra.mxu0 %v955
    %1521 = vmatprep.mubr.bf16.mxu0 %v109
    %1522 = vmatmul.mubr.bf16.gmra.mxu0 %v108
    %v1523 = vpop.f32.mrf.mxu0
    %v1524 = vadd.f32 %v324, %v1523
    %v1525 = vpop.f32.mrf.mxu0
    %v1526 = vadd.f32 %v328, %v1525
    %v1527 = vpop.f32.mrf.mxu0
    %v1528 = vadd.f32 %v324, %v1527
    %v1529 = vpop.f32.mrf.mxu0
    %v1530 = vadd.f32 %v328, %v1529
    %1531 = vdwg.mxu0
    %1532 = vmatprep.subr.bf16.mxu0 %v1016
    %1533 = vmatpush1.bf16.msra.mxu0 %v1015
    %1534 = vmatprep.subr.bf16.mxu0 %v1012
    %1535 = vmatpush1.bf16.msra.mxu0 %v1011
    %1536 = vmatprep.subr.bf16.mxu0 %v1008
    %1537 = vmatpush1.bf16.msra.mxu0 %v1007
    %1538 = vmatprep.subr.bf16.mxu0 %v1004
    %1539 = vmatpush1.bf16.msra.mxu0 %v1003
    %1540 = vmatprep.subr.bf16.mxu0 %v1000
    %1541 = vmatpush1.bf16.msra.mxu0 %v999
    %1542 = vmatprep.subr.bf16.mxu0 %v996
    %1543 = vmatpush1.bf16.msra.mxu0 %v995
    %1544 = vmatprep.subr.bf16.mxu0 %v992
    %1545 = vmatpush1.bf16.msra.mxu0 %v991
    %1546 = vmatprep.subr.bf16.mxu0 %v988
    %1547 = vmatpush1.bf16.msra.mxu0 %v987
    %1548 = vmatprep.subr.bf16.mxu0 %v1048
    %1549 = vmatpush2.bf16.msra.mxu0 %v1047
    %1550 = vmatprep.subr.bf16.mxu0 %v1044
    %1551 = vmatpush2.bf16.msra.mxu0 %v1043
    %1552 = vmatprep.subr.bf16.mxu0 %v1040
    %1553 = vmatpush2.bf16.msra.mxu0 %v1039
    %1554 = vmatprep.subr.bf16.mxu0 %v1036
    %1555 = vmatpush2.bf16.msra.mxu0 %v1035
    %1556 = vmatprep.subr.bf16.mxu0 %v1032
    %1557 = vmatpush2.bf16.msra.mxu0 %v1031
    %1558 = vmatprep.subr.bf16.mxu0 %v1028
    %1559 = vmatpush2.bf16.msra.mxu0 %v1027
    %1560 = vmatprep.subr.bf16.mxu0 %v1024
    %1561 = vmatpush2.bf16.msra.mxu0 %v1023
    %1562 = vmatprep.subr.bf16.mxu0 %v1020
    %1563 = vmatpush2.bf16.msra.mxu0 %v1019
    %1564 = vmatprep.mubr.bf16.mxu0 %v111
    %1565 = vmatmul.mubr.bf16.gmra.mxu0 %v110
    %v1566 = vpop.f32.mrf.mxu0
    %v1567 = vadd.f32 %v1524, %v1566
    %v1568 = vpop.f32.mrf.mxu0
    %v1569 = vadd.f32 %v1526, %v1568
    %v1570 = vpop.f32.mrf.mxu0
    %v1571 = vadd.f32 %v1528, %v1570
    %v1572 = vpop.f32.mrf.mxu0
    %v1573 = vadd.f32 %v1530, %v1572
    %1574 = vdwg.mxu0
    %1575 = vmatprep.subr.bf16.mxu0 %v1080
    %1576 = vmatpush1.bf16.msra.mxu0 %v1079
    %1577 = vmatprep.subr.bf16.mxu0 %v1076
    %1578 = vmatpush1.bf16.msra.mxu0 %v1075
    %1579 = vmatprep.subr.bf16.mxu0 %v1072
    %1580 = vmatpush1.bf16.msra.mxu0 %v1071
    %1581 = vmatprep.subr.bf16.mxu0 %v1068
    %1582 = vmatpush1.bf16.msra.mxu0 %v1067
    %1583 = vmatprep.subr.bf16.mxu0 %v1064
    %1584 = vmatpush1.bf16.msra.mxu0 %v1063
    %1585 = vmatprep.subr.bf16.mxu0 %v1060
    %1586 = vmatpush1.bf16.msra.mxu0 %v1059
    %1587 = vmatprep.subr.bf16.mxu0 %v1056
    %1588 = vmatpush1.bf16.msra.mxu0 %v1055
    %1589 = vmatprep.subr.bf16.mxu0 %v1052
    %1590 = vmatpush1.bf16.msra.mxu0 %v1051
    %1591 = vmatprep.subr.bf16.mxu0 %v1112
    %1592 = vmatpush2.bf16.msra.mxu0 %v1111
    %1593 = vmatprep.subr.bf16.mxu0 %v1108
    %1594 = vmatpush2.bf16.msra.mxu0 %v1107
    %1595 = vmatprep.subr.bf16.mxu0 %v1104
    %1596 = vmatpush2.bf16.msra.mxu0 %v1103
    %1597 = vmatprep.subr.bf16.mxu0 %v1100
    %1598 = vmatpush2.bf16.msra.mxu0 %v1099
    %1599 = vmatprep.subr.bf16.mxu0 %v1096
    %1600 = vmatpush2.bf16.msra.mxu0 %v1095
    %1601 = vmatprep.subr.bf16.mxu0 %v1092
    %1602 = vmatpush2.bf16.msra.mxu0 %v1091
    %1603 = vmatprep.subr.bf16.mxu0 %v1088
    %1604 = vmatpush2.bf16.msra.mxu0 %v1087
    %1605 = vmatprep.subr.bf16.mxu0 %v1084
    %1606 = vmatpush2.bf16.msra.mxu0 %v1083
    %1607 = vmatprep.mubr.bf16.mxu0 %v113
    %1608 = vmatmul.mubr.bf16.gmra.mxu0 %v112
    %v1609 = vpop.f32.mrf.mxu0
    %v1610 = vadd.f32 %v1567, %v1609
    %v1611 = vpop.f32.mrf.mxu0
    %v1612 = vadd.f32 %v1569, %v1611
    %v1613 = vpop.f32.mrf.mxu0
    %v1614 = vadd.f32 %v1571, %v1613
    %v1615 = vpop.f32.mrf.mxu0
    %v1616 = vadd.f32 %v1573, %v1615
    %1617 = vdwg.mxu0
    %1618 = vmatprep.subr.bf16.mxu0 0
    %1619 = vmatpush1.bf16.msra.mxu0 0
    %1620 = vmatprep.subr.bf16.mxu0 0
    %1621 = vmatpush1.bf16.msra.mxu0 0
    %1622 = vmatprep.subr.bf16.mxu0 0
    %1623 = vmatpush1.bf16.msra.mxu0 0
    %1624 = vmatprep.subr.bf16.mxu0 0
    %1625 = vmatpush1.bf16.msra.mxu0 0
    %1626 = vmatprep.subr.bf16.mxu0 0
    %1627 = vmatpush1.bf16.msra.mxu0 0
    %1628 = vmatprep.subr.bf16.mxu0 0
    %1629 = vmatpush1.bf16.msra.mxu0 0
    %1630 = vmatprep.subr.bf16.mxu0 0
    %1631 = vmatpush1.bf16.msra.mxu0 0
    %1632 = vmatprep.subr.bf16.mxu0 %v1116
    %1633 = vmatpush1.bf16.msra.mxu0 %v1115
    %1634 = vmatprep.subr.bf16.mxu0 0
    %1635 = vmatpush2.bf16.msra.mxu0 0
    %1636 = vmatprep.subr.bf16.mxu0 0
    %1637 = vmatpush2.bf16.msra.mxu0 0
    %1638 = vmatprep.subr.bf16.mxu0 0
    %1639 = vmatpush2.bf16.msra.mxu0 0
    %1640 = vmatprep.subr.bf16.mxu0 0
    %1641 = vmatpush2.bf16.msra.mxu0 0
    %1642 = vmatprep.subr.bf16.mxu0 0
    %1643 = vmatpush2.bf16.msra.mxu0 0
    %1644 = vmatprep.subr.bf16.mxu0 0
    %1645 = vmatpush2.bf16.msra.mxu0 0
    %1646 = vmatprep.subr.bf16.mxu0 0
    %1647 = vmatpush2.bf16.msra.mxu0 0
    %1648 = vmatprep.subr.bf16.mxu0 0
    %1649 = vmatpush2.bf16.msra.mxu0 0
    %1650 = vmatprep.mubr.bf16.mxu0 0
    %1651 = vmatmul.mubr.bf16.gmra.mxu0 %v1315
    %v1652 = vpop.f32.mrf.mxu0
    %v1653 = vadd.f32 %v1610, %v1652
    %v1654 = vpop.f32.mrf.mxu0
    %v1655 = vadd.f32 %v1612, %v1654
    %v1656 = vpop.f32.mrf.mxu0
    %v1657 = vadd.f32 %v1614, %v1656
    %v1658 = vpop.f32.mrf.mxu0
    %v1659 = vadd.f32 %v1616, %v1658
    %1660 = vdwg.mxu0
    %vm1661 = vcmp.ge.f32.partialorder %v1481, 0.0
    %vm1662 = vcmp.ge.f32.partialorder %v1483, 0.0
    %vm1663 = vcmp.ge.f32.partialorder %v1653, 0.0
    %vm1664 = vcmp.ge.f32.partialorder %v1655, 0.0
    %vm1665 = vcmp.ge.f32.partialorder %v1485, 0.0
    %vm1666 = vcmp.ge.f32.partialorder %v1487, 0.0
    %vm1667 = vcmp.ge.f32.partialorder %v1657, 0.0
    %vm1668 = vcmp.ge.f32.partialorder %v1659, 0.0
    %v1669 = vmul.f32 %v1481, 0.2
    %v1670 = vmul.f32 %v1483, 0.2
    %v1671 = vmul.f32 %v1653, 0.2
    %v1672 = vmul.f32 %v1655, 0.2
    %v1673 = vmul.f32 %v1485, 0.2
    %v1674 = vmul.f32 %v1487, 0.2
    %v1675 = vmul.f32 %v1657, 0.2
    %v1676 = vmul.f32 %v1659, 0.2
    %v1677 = vsel %vm1661, %v1481, %v1669
    %v1678 = vsel %vm1662, %v1483, %v1670
    %v1679 = vsel %vm1663, %v1653, %v1671
    %v1680 = vsel %vm1664, %v1655, %v1672
    %v1681 = vsel %vm1665, %v1485, %v1673
    %v1682 = vsel %vm1666, %v1487, %v1674
    %v1683 = vsel %vm1667, %v1657, %v1675
    %v1684 = vsel %vm1668, %v1659, %v1676
    %v1685 = vpack.c.bf16 %v1681, %v1677
    %v1686 = vpack.c.bf16 %v1682, %v1678
    %v1687 = vpack.c.bf16 %v1683, %v1679
    %v1688 = vpack.c.bf16 %v1684, %v1680
    %v1689 = vld [vmem:[#allocation8] sm:$0xff]
    %v1690 = vld [vmem:[#allocation8 + $0x8] sm:$0xff]
    %v1691 = vld [vmem:[#allocation8 + $0x10] sm:$0xff]
    %v1692 = vld [vmem:[#allocation8 + $0x18] sm:$0xff]
    %v1693 = vld [vmem:[#allocation8 + $0x20] sm:$0xff]
    %v1694 = vld [vmem:[#allocation8 + $0x28] sm:$0xff]
    %v1695 = vld [vmem:[#allocation8 + $0x30] sm:$0xff]
    %v1696 = vld [vmem:[#allocation8 + $0x38] sm:$0xff]
    %v1697 = vld [vmem:[#allocation8 + $0x40] sm:$0xff]
    %v1698 = vld [vmem:[#allocation8 + $0x48] sm:$0xff]
    %v1699 = vld [vmem:[#allocation8 + $0x50] sm:$0xff]
    %v1700 = vld [vmem:[#allocation8 + $0x58] sm:$0xff]
    %v1701 = vld [vmem:[#allocation8 + $0x60] sm:$0xff]
    %v1702 = vld [vmem:[#allocation8 + $0x68] sm:$0xff]
    %v1703 = vld [vmem:[#allocation8 + $0x70] sm:$0xff]
    %v1704 = vld [vmem:[#allocation8 + $0x78] sm:$0xff]
    %v1705 = vld [vmem:[#allocation8 + $0x80] sm:$0xff]
    %v1706 = vld [vmem:[#allocation8 + $0x88] sm:$0xff]
    %v1707 = vld [vmem:[#allocation8 + $0x90] sm:$0xff]
    %v1708 = vld [vmem:[#allocation8 + $0x98] sm:$0xff]
    %v1709 = vld [vmem:[#allocation8 + $0xa0] sm:$0xff]
    %v1710 = vld [vmem:[#allocation8 + $0xa8] sm:$0xff]
    %v1711 = vld [vmem:[#allocation8 + $0xb0] sm:$0xff]
    %v1712 = vld [vmem:[#allocation8 + $0xb8] sm:$0xff]
    %v1713 = vld [vmem:[#allocation8 + $0xc0] sm:$0xff]
    %v1714 = vld [vmem:[#allocation8 + $0xc8] sm:$0xff]
    %v1715 = vld [vmem:[#allocation8 + $0xd0] sm:$0xff]
    %v1716 = vld [vmem:[#allocation8 + $0xd8] sm:$0xff]
    %v1717 = vld [vmem:[#allocation8 + $0xe0] sm:$0xff]
    %v1718 = vld [vmem:[#allocation8 + $0xe8] sm:$0xff]
    %v1719 = vld [vmem:[#allocation8 + $0xf0] sm:$0xff]
    %v1720 = vld [vmem:[#allocation8 + $0xf8] sm:$0xff]
    %v1721 = vld [vmem:[#allocation8 + $0x100] sm:$0xff]
    %v1722 = vld [vmem:[#allocation8 + $0x108] sm:$0xff]
    %v1723 = vld [vmem:[#allocation8 + $0x110] sm:$0xff]
    %v1724 = vld [vmem:[#allocation8 + $0x118] sm:$0xff]
    %v1725 = vld [vmem:[#allocation8 + $0x120] sm:$0xff]
    %v1726 = vld [vmem:[#allocation8 + $0x128] sm:$0xff]
    %v1727 = vld [vmem:[#allocation8 + $0x130] sm:$0xff]
    %v1728 = vld [vmem:[#allocation8 + $0x138] sm:$0xff]
    %v1729 = vld [vmem:[#allocation8 + $0x140] sm:$0xff]
    %v1730 = vld [vmem:[#allocation8 + $0x148] sm:$0xff]
    %v1731 = vld [vmem:[#allocation8 + $0x150] sm:$0xff]
    %v1732 = vld [vmem:[#allocation8 + $0x158] sm:$0xff]
    %v1733 = vld [vmem:[#allocation8 + $0x160] sm:$0xff]
    %v1734 = vld [vmem:[#allocation8 + $0x168] sm:$0xff]
    %v1735 = vld [vmem:[#allocation8 + $0x170] sm:$0xff]
    %v1736 = vld [vmem:[#allocation8 + $0x178] sm:$0xff]
    %v1737 = vld [vmem:[#allocation8 + $0x180] sm:$0xff]
    %v1738 = vld [vmem:[#allocation8 + $0x188] sm:$0xff]
    %v1739 = vld [vmem:[#allocation8 + $0x190] sm:$0xff]
    %v1740 = vld [vmem:[#allocation8 + $0x198] sm:$0xff]
    %v1741 = vld [vmem:[#allocation8 + $0x1a0] sm:$0xff]
    %v1742 = vld [vmem:[#allocation8 + $0x1a8] sm:$0xff]
    %v1743 = vld [vmem:[#allocation8 + $0x1b0] sm:$0xff]
    %v1744 = vld [vmem:[#allocation8 + $0x1b8] sm:$0xff]
    %v1745 = vld [vmem:[#allocation8 + $0x1c0] sm:$0xff]
    %v1746 = vld [vmem:[#allocation8 + $0x1c8] sm:$0xff]
    %v1747 = vld [vmem:[#allocation8 + $0x1d0] sm:$0xff]
    %v1748 = vld [vmem:[#allocation8 + $0x1d8] sm:$0xff]
    %v1749 = vld [vmem:[#allocation8 + $0x1e0] sm:$0xff]
    %v1750 = vld [vmem:[#allocation8 + $0x1e8] sm:$0xff]
    %v1751 = vld [vmem:[#allocation8 + $0x1f0] sm:$0xff]
    %v1752 = vld [vmem:[#allocation8 + $0x1f8] sm:$0xff]
    %v1753 = vld [vmem:[%s4] sm:$0x3]
    %v1755 = vlaneseq
    %v1756 = vshrl.u32 %v1755, 7
    %v1757 = vsub.s32 0, %v1756
    %v1758 = vrot.slane %v1753, %v1757
    %v1759 = vlaneseq
    %v1760 = vshrl.u32 %v1759, 7
    %v1761 = vsub.s32 1, %v1760
    %v1762 = vrot.slane %v1753, %v1761
    %v1829 = vunpack.c.l.b16 %v1689
    %v1830 = vunpack.c.h.b16 %v1689
    %v1831 = vunpack.c.l.b16 %v1690
    %v1832 = vunpack.c.h.b16 %v1690
    %v1833 = vunpack.c.l.b16 %v1691
    %v1834 = vunpack.c.h.b16 %v1691
    %v1835 = vunpack.c.l.b16 %v1692
    %v1836 = vunpack.c.h.b16 %v1692
    %v1837 = vunpack.c.l.b16 %v1693
    %v1838 = vunpack.c.h.b16 %v1693
    %v1839 = vunpack.c.l.b16 %v1694
    %v1840 = vunpack.c.h.b16 %v1694
    %v1841 = vunpack.c.l.b16 %v1695
    %v1842 = vunpack.c.h.b16 %v1695
    %v1843 = vunpack.c.l.b16 %v1696
    %v1844 = vunpack.c.h.b16 %v1696
    %v1845 = vunpack.c.l.b16 %v1697
    %v1846 = vunpack.c.h.b16 %v1697
    %v1847 = vunpack.c.l.b16 %v1698
    %v1848 = vunpack.c.h.b16 %v1698
    %v1849 = vunpack.c.l.b16 %v1699
    %v1850 = vunpack.c.h.b16 %v1699
    %v1851 = vunpack.c.l.b16 %v1700
    %v1852 = vunpack.c.h.b16 %v1700
    %v1853 = vunpack.c.l.b16 %v1701
    %v1854 = vunpack.c.h.b16 %v1701
    %v1855 = vunpack.c.l.b16 %v1702
    %v1856 = vunpack.c.h.b16 %v1702
    %v1857 = vunpack.c.l.b16 %v1703
    %v1858 = vunpack.c.h.b16 %v1703
    %v1859 = vunpack.c.l.b16 %v1704
    %v1860 = vunpack.c.h.b16 %v1704
    %v1861 = vunpack.c.l.b16 %v1705
    %v1862 = vunpack.c.h.b16 %v1705
    %v1863 = vunpack.c.l.b16 %v1706
    %v1864 = vunpack.c.h.b16 %v1706
    %v1865 = vunpack.c.l.b16 %v1707
    %v1866 = vunpack.c.h.b16 %v1707
    %v1867 = vunpack.c.l.b16 %v1708
    %v1868 = vunpack.c.h.b16 %v1708
    %v1869 = vunpack.c.l.b16 %v1709
    %v1870 = vunpack.c.h.b16 %v1709
    %v1871 = vunpack.c.l.b16 %v1710
    %v1872 = vunpack.c.h.b16 %v1710
    %v1873 = vunpack.c.l.b16 %v1711
    %v1874 = vunpack.c.h.b16 %v1711
    %v1875 = vunpack.c.l.b16 %v1712
    %v1876 = vunpack.c.h.b16 %v1712
    %v1877 = vunpack.c.l.b16 %v1713
    %v1878 = vunpack.c.h.b16 %v1713
    %v1879 = vunpack.c.l.b16 %v1714
    %v1880 = vunpack.c.h.b16 %v1714
    %v1881 = vunpack.c.l.b16 %v1715
    %v1882 = vunpack.c.h.b16 %v1715
    %v1883 = vunpack.c.l.b16 %v1716
    %v1884 = vunpack.c.h.b16 %v1716
    %v1885 = vunpack.c.l.b16 %v1717
    %v1886 = vunpack.c.h.b16 %v1717
    %v1887 = vunpack.c.l.b16 %v1718
    %v1888 = vunpack.c.h.b16 %v1718
    %v1889 = vunpack.c.l.b16 %v1719
    %v1890 = vunpack.c.h.b16 %v1719
    %v1891 = vunpack.c.l.b16 %v1720
    %v1892 = vunpack.c.h.b16 %v1720
    %v1893 = vunpack.c.l.b16 %v1721
    %v1894 = vunpack.c.h.b16 %v1721
    %v1895 = vunpack.c.l.b16 %v1722
    %v1896 = vunpack.c.h.b16 %v1722
    %v1897 = vunpack.c.l.b16 %v1723
    %v1898 = vunpack.c.h.b16 %v1723
    %v1899 = vunpack.c.l.b16 %v1724
    %v1900 = vunpack.c.h.b16 %v1724
    %v1901 = vunpack.c.l.b16 %v1725
    %v1902 = vunpack.c.h.b16 %v1725
    %v1903 = vunpack.c.l.b16 %v1726
    %v1904 = vunpack.c.h.b16 %v1726
    %v1905 = vunpack.c.l.b16 %v1727
    %v1906 = vunpack.c.h.b16 %v1727
    %v1907 = vunpack.c.l.b16 %v1728
    %v1908 = vunpack.c.h.b16 %v1728
    %v1909 = vunpack.c.l.b16 %v1729
    %v1910 = vunpack.c.h.b16 %v1729
    %v1911 = vunpack.c.l.b16 %v1730
    %v1912 = vunpack.c.h.b16 %v1730
    %v1913 = vunpack.c.l.b16 %v1731
    %v1914 = vunpack.c.h.b16 %v1731
    %v1915 = vunpack.c.l.b16 %v1732
    %v1916 = vunpack.c.h.b16 %v1732
    %v1917 = vunpack.c.l.b16 %v1733
    %v1918 = vunpack.c.h.b16 %v1733
    %v1919 = vunpack.c.l.b16 %v1734
    %v1920 = vunpack.c.h.b16 %v1734
    %v1921 = vunpack.c.l.b16 %v1735
    %v1922 = vunpack.c.h.b16 %v1735
    %v1923 = vunpack.c.l.b16 %v1736
    %v1924 = vunpack.c.h.b16 %v1736
    %v1925 = vunpack.c.l.b16 %v1737
    %v1926 = vunpack.c.h.b16 %v1737
    %v1927 = vunpack.c.l.b16 %v1738
    %v1928 = vunpack.c.h.b16 %v1738
    %v1929 = vunpack.c.l.b16 %v1739
    %v1930 = vunpack.c.h.b16 %v1739
    %v1931 = vunpack.c.l.b16 %v1740
    %v1932 = vunpack.c.h.b16 %v1740
    %v1933 = vunpack.c.l.b16 %v1741
    %v1934 = vunpack.c.h.b16 %v1741
    %v1935 = vunpack.c.l.b16 %v1742
    %v1936 = vunpack.c.h.b16 %v1742
    %v1937 = vunpack.c.l.b16 %v1743
    %v1938 = vunpack.c.h.b16 %v1743
    %v1939 = vunpack.c.l.b16 %v1744
    %v1940 = vunpack.c.h.b16 %v1744
    %v1941 = vunpack.c.l.b16 %v1745
    %v1942 = vunpack.c.h.b16 %v1745
    %v1943 = vunpack.c.l.b16 %v1746
    %v1944 = vunpack.c.h.b16 %v1746
    %v1945 = vunpack.c.l.b16 %v1747
    %v1946 = vunpack.c.h.b16 %v1747
    %v1947 = vunpack.c.l.b16 %v1748
    %v1948 = vunpack.c.h.b16 %v1748
    %v1949 = vunpack.c.l.b16 %v1749
    %v1950 = vunpack.c.h.b16 %v1749
    %v1951 = vunpack.c.l.b16 %v1750
    %v1952 = vunpack.c.h.b16 %v1750
    %v1953 = vunpack.c.l.b16 %v1751
    %v1954 = vunpack.c.h.b16 %v1751
    %v1955 = vunpack.c.l.b16 %v1752
    %v1956 = vunpack.c.h.b16 %v1752
    %v1957 = vpack.c.b16 %v1831, %v1829
    %v1958 = vpack.c.b16 %v1832, %v1830
    %v1959 = vpack.c.b16 %v1835, %v1833
    %v1960 = vpack.c.b16 %v1836, %v1834
    %v1961 = vpack.c.b16 %v1839, %v1837
    %v1962 = vpack.c.b16 %v1840, %v1838
    %v1963 = vpack.c.b16 %v1843, %v1841
    %v1964 = vpack.c.b16 %v1844, %v1842
    %v1965 = vpack.c.b16 %v1847, %v1845
    %v1966 = vpack.c.b16 %v1848, %v1846
    %v1967 = vpack.c.b16 %v1851, %v1849
    %v1968 = vpack.c.b16 %v1852, %v1850
    %v1969 = vpack.c.b16 %v1855, %v1853
    %v1970 = vpack.c.b16 %v1856, %v1854
    %v1971 = vpack.c.b16 %v1859, %v1857
    %v1972 = vpack.c.b16 %v1860, %v1858
    %v1973 = vpack.c.b16 %v1863, %v1861
    %v1974 = vpack.c.b16 %v1864, %v1862
    %v1975 = vpack.c.b16 %v1867, %v1865
    %v1976 = vpack.c.b16 %v1868, %v1866
    %v1977 = vpack.c.b16 %v1871, %v1869
    %v1978 = vpack.c.b16 %v1872, %v1870
    %v1979 = vpack.c.b16 %v1875, %v1873
    %v1980 = vpack.c.b16 %v1876, %v1874
    %v1981 = vpack.c.b16 %v1879, %v1877
    %v1982 = vpack.c.b16 %v1880, %v1878
    %v1983 = vpack.c.b16 %v1883, %v1881
    %v1984 = vpack.c.b16 %v1884, %v1882
    %v1985 = vpack.c.b16 %v1887, %v1885
    %v1986 = vpack.c.b16 %v1888, %v1886
    %v1987 = vpack.c.b16 %v1891, %v1889
    %v1988 = vpack.c.b16 %v1892, %v1890
    %v1989 = vpack.c.b16 %v1895, %v1893
    %v1990 = vpack.c.b16 %v1896, %v1894
    %v1991 = vpack.c.b16 %v1899, %v1897
    %v1992 = vpack.c.b16 %v1900, %v1898
    %v1993 = vpack.c.b16 %v1903, %v1901
    %v1994 = vpack.c.b16 %v1904, %v1902
    %v1995 = vpack.c.b16 %v1907, %v1905
    %v1996 = vpack.c.b16 %v1908, %v1906
    %v1997 = vpack.c.b16 %v1911, %v1909
    %v1998 = vpack.c.b16 %v1912, %v1910
    %v1999 = vpack.c.b16 %v1915, %v1913
    %v2000 = vpack.c.b16 %v1916, %v1914
    %v2001 = vpack.c.b16 %v1919, %v1917
    %v2002 = vpack.c.b16 %v1920, %v1918
    %v2003 = vpack.c.b16 %v1923, %v1921
    %v2004 = vpack.c.b16 %v1924, %v1922
    %v2005 = vpack.c.b16 %v1927, %v1925
    %v2006 = vpack.c.b16 %v1928, %v1926
    %v2007 = vpack.c.b16 %v1931, %v1929
    %v2008 = vpack.c.b16 %v1932, %v1930
    %v2009 = vpack.c.b16 %v1935, %v1933
    %v2010 = vpack.c.b16 %v1936, %v1934
    %v2011 = vpack.c.b16 %v1939, %v1937
    %v2012 = vpack.c.b16 %v1940, %v1938
    %v2013 = vpack.c.b16 %v1943, %v1941
    %v2014 = vpack.c.b16 %v1944, %v1942
    %v2015 = vpack.c.b16 %v1947, %v1945
    %v2016 = vpack.c.b16 %v1948, %v1946
    %v2017 = vpack.c.b16 %v1951, %v1949
    %v2018 = vpack.c.b16 %v1952, %v1950
    %v2019 = vpack.c.b16 %v1955, %v1953
    %v2020 = vpack.c.b16 %v1956, %v1954
    %2085 = vmatprep.subr.bf16.mxu0 %v1972
    %2086 = vmatpush1.bf16.msra.mxu0 %v1971
    %2087 = vmatprep.subr.bf16.mxu0 %v1970
    %2088 = vmatpush1.bf16.msra.mxu0 %v1969
    %2089 = vmatprep.subr.bf16.mxu0 %v1968
    %2090 = vmatpush1.bf16.msra.mxu0 %v1967
    %2091 = vmatprep.subr.bf16.mxu0 %v1966
    %2092 = vmatpush1.bf16.msra.mxu0 %v1965
    %2093 = vmatprep.subr.bf16.mxu0 %v1964
    %2094 = vmatpush1.bf16.msra.mxu0 %v1963
    %2095 = vmatprep.subr.bf16.mxu0 %v1962
    %2096 = vmatpush1.bf16.msra.mxu0 %v1961
    %2097 = vmatprep.subr.bf16.mxu0 %v1960
    %2098 = vmatpush1.bf16.msra.mxu0 %v1959
    %2099 = vmatprep.subr.bf16.mxu0 %v1958
    %2100 = vmatpush1.bf16.msra.mxu0 %v1957
    %2101 = vmatprep.subr.bf16.mxu0 %v1988
    %2102 = vmatpush2.bf16.msra.mxu0 %v1987
    %2103 = vmatprep.subr.bf16.mxu0 %v1986
    %2104 = vmatpush2.bf16.msra.mxu0 %v1985
    %2105 = vmatprep.subr.bf16.mxu0 %v1984
    %2106 = vmatpush2.bf16.msra.mxu0 %v1983
    %2107 = vmatprep.subr.bf16.mxu0 %v1982
    %2108 = vmatpush2.bf16.msra.mxu0 %v1981
    %2109 = vmatprep.subr.bf16.mxu0 %v1980
    %2110 = vmatpush2.bf16.msra.mxu0 %v1979
    %2111 = vmatprep.subr.bf16.mxu0 %v1978
    %2112 = vmatpush2.bf16.msra.mxu0 %v1977
    %2113 = vmatprep.subr.bf16.mxu0 %v1976
    %2114 = vmatpush2.bf16.msra.mxu0 %v1975
    %2115 = vmatprep.subr.bf16.mxu0 %v1974
    %2116 = vmatpush2.bf16.msra.mxu0 %v1973
    %2117 = vmatprep.mubr.bf16.mxu0 %v1686
    %2118 = vmatmul.mubr.bf16.gmra.mxu0 %v1685
    %v2119 = vpop.f32.mrf.mxu0
    %v2120 = vadd.f32 %v1758, %v2119
    %v2121 = vpop.f32.mrf.mxu0
    %v2122 = vadd.f32 %v1762, %v2121
    %v2123 = vpop.f32.mrf.mxu0
    %v2124 = vadd.f32 %v1758, %v2123
    %v2125 = vpop.f32.mrf.mxu0
    %v2126 = vadd.f32 %v1762, %v2125
    %2127 = vdwg.mxu0
    %2128 = vmatprep.subr.bf16.mxu0 %v2004
    %2129 = vmatpush1.bf16.msra.mxu0 %v2003
    %2130 = vmatprep.subr.bf16.mxu0 %v2002
    %2131 = vmatpush1.bf16.msra.mxu0 %v2001
    %2132 = vmatprep.subr.bf16.mxu0 %v2000
    %2133 = vmatpush1.bf16.msra.mxu0 %v1999
    %2134 = vmatprep.subr.bf16.mxu0 %v1998
    %2135 = vmatpush1.bf16.msra.mxu0 %v1997
    %2136 = vmatprep.subr.bf16.mxu0 %v1996
    %2137 = vmatpush1.bf16.msra.mxu0 %v1995
    %2138 = vmatprep.subr.bf16.mxu0 %v1994
    %2139 = vmatpush1.bf16.msra.mxu0 %v1993
    %2140 = vmatprep.subr.bf16.mxu0 %v1992
    %2141 = vmatpush1.bf16.msra.mxu0 %v1991
    %2142 = vmatprep.subr.bf16.mxu0 %v1990
    %2143 = vmatpush1.bf16.msra.mxu0 %v1989
    %2144 = vmatprep.subr.bf16.mxu0 %v2020
    %2145 = vmatpush2.bf16.msra.mxu0 %v2019
    %2146 = vmatprep.subr.bf16.mxu0 %v2018
    %2147 = vmatpush2.bf16.msra.mxu0 %v2017
    %2148 = vmatprep.subr.bf16.mxu0 %v2016
    %2149 = vmatpush2.bf16.msra.mxu0 %v2015
    %2150 = vmatprep.subr.bf16.mxu0 %v2014
    %2151 = vmatpush2.bf16.msra.mxu0 %v2013
    %2152 = vmatprep.subr.bf16.mxu0 %v2012
    %2153 = vmatpush2.bf16.msra.mxu0 %v2011
    %2154 = vmatprep.subr.bf16.mxu0 %v2010
    %2155 = vmatpush2.bf16.msra.mxu0 %v2009
    %2156 = vmatprep.subr.bf16.mxu0 %v2008
    %2157 = vmatpush2.bf16.msra.mxu0 %v2007
    %2158 = vmatprep.subr.bf16.mxu0 %v2006
    %2159 = vmatpush2.bf16.msra.mxu0 %v2005
    %2160 = vmatprep.mubr.bf16.mxu0 %v1688
    %2161 = vmatmul.mubr.bf16.gmra.mxu0 %v1687
    %v2162 = vpop.f32.mrf.mxu0
    %v2163 = vadd.f32 %v2120, %v2162
    %v2164 = vpop.f32.mrf.mxu0
    %v2165 = vadd.f32 %v2122, %v2164
    %v2166 = vpop.f32.mrf.mxu0
    %v2167 = vadd.f32 %v2124, %v2166
    %v2168 = vpop.f32.mrf.mxu0
    %v2169 = vadd.f32 %v2126, %v2168
    %2170 = vdwg.mxu0
    %vm2171 = vcmp.ge.f32.partialorder %v2163, 0.0
    %vm2172 = vcmp.ge.f32.partialorder %v2165, 0.0
    %vm2173 = vcmp.ge.f32.partialorder %v2167, 0.0
    %vm2174 = vcmp.ge.f32.partialorder %v2169, 0.0
    %v2175 = vmul.f32 %v2163, 0.2
    %v2176 = vmul.f32 %v2165, 0.2
    %v2177 = vmul.f32 %v2167, 0.2
    %v2178 = vmul.f32 %v2169, 0.2
    %v2179 = vsel %vm2171, %v2163, %v2175
    %v2180 = vsel %vm2172, %v2165, %v2176
    %v2181 = vsel %vm2173, %v2167, %v2177
    %v2182 = vsel %vm2174, %v2169, %v2178
    %v2183 = vpack.c.bf16 %v2181, %v2179
    %v2184 = vpack.c.bf16 %v2182, %v2180
    %v2185 = vld [vmem:[#allocation10] sm:$0xf]
    %v2186 = vld [vmem:[#allocation10 + $0x4] sm:$0xf]
    %v2187 = vld [vmem:[#allocation10 + $0x8] sm:$0xf]
    %v2188 = vld [vmem:[#allocation10 + $0xc] sm:$0xf]
    %v2189 = vld [vmem:[#allocation10 + $0x10] sm:$0xf]
    %v2190 = vld [vmem:[#allocation10 + $0x14] sm:$0xf]
    %v2191 = vld [vmem:[#allocation10 + $0x18] sm:$0xf]
    %v2192 = vld [vmem:[#allocation10 + $0x1c] sm:$0xf]
    %v2193 = vld [vmem:[#allocation10 + $0x20] sm:$0xf]
    %v2194 = vld [vmem:[#allocation10 + $0x24] sm:$0xf]
    %v2195 = vld [vmem:[#allocation10 + $0x28] sm:$0xf]
    %v2196 = vld [vmem:[#allocation10 + $0x2c] sm:$0xf]
    %v2197 = vld [vmem:[#allocation10 + $0x30] sm:$0xf]
    %v2198 = vld [vmem:[#allocation10 + $0x34] sm:$0xf]
    %v2199 = vld [vmem:[#allocation10 + $0x38] sm:$0xf]
    %v2200 = vld [vmem:[#allocation10 + $0x3c] sm:$0xf]
    %v2201 = vld [vmem:[#allocation10 + $0x40] sm:$0xf]
    %v2202 = vld [vmem:[#allocation10 + $0x44] sm:$0xf]
    %v2203 = vld [vmem:[#allocation10 + $0x48] sm:$0xf]
    %v2204 = vld [vmem:[#allocation10 + $0x4c] sm:$0xf]
    %v2205 = vld [vmem:[#allocation10 + $0x50] sm:$0xf]
    %v2206 = vld [vmem:[#allocation10 + $0x54] sm:$0xf]
    %v2207 = vld [vmem:[#allocation10 + $0x58] sm:$0xf]
    %v2208 = vld [vmem:[#allocation10 + $0x5c] sm:$0xf]
    %v2209 = vld [vmem:[#allocation10 + $0x60] sm:$0xf]
    %v2210 = vld [vmem:[#allocation10 + $0x64] sm:$0xf]
    %v2211 = vld [vmem:[#allocation10 + $0x68] sm:$0xf]
    %v2212 = vld [vmem:[#allocation10 + $0x6c] sm:$0xf]
    %v2213 = vld [vmem:[#allocation10 + $0x70] sm:$0xf]
    %v2214 = vld [vmem:[#allocation10 + $0x74] sm:$0xf]
    %v2215 = vld [vmem:[#allocation10 + $0x78] sm:$0xf]
    %v2216 = vld [vmem:[#allocation10 + $0x7c] sm:$0xf]
    %v2217 = vld [vmem:[%s6] sm:$0x1]
    %v2219 = vlaneseq
    %v2220 = vshrl.u32 %v2219, 7
    %v2221 = vsub.s32 0, %v2220
    %v2222 = vrot.slane %v2217, %v2221
    %v2256 = vunpack.c.l.b16 %v2185
    %v2257 = vunpack.c.l.b16 %v2186
    %v2258 = vunpack.c.l.b16 %v2187
    %v2259 = vunpack.c.l.b16 %v2188
    %v2260 = vunpack.c.l.b16 %v2189
    %v2261 = vunpack.c.l.b16 %v2190
    %v2262 = vunpack.c.l.b16 %v2191
    %v2263 = vunpack.c.l.b16 %v2192
    %v2264 = vunpack.c.l.b16 %v2193
    %v2265 = vunpack.c.l.b16 %v2194
    %v2266 = vunpack.c.l.b16 %v2195
    %v2267 = vunpack.c.l.b16 %v2196
    %v2268 = vunpack.c.l.b16 %v2197
    %v2269 = vunpack.c.l.b16 %v2198
    %v2270 = vunpack.c.l.b16 %v2199
    %v2271 = vunpack.c.l.b16 %v2200
    %v2272 = vunpack.c.l.b16 %v2201
    %v2273 = vunpack.c.l.b16 %v2202
    %v2274 = vunpack.c.l.b16 %v2203
    %v2275 = vunpack.c.l.b16 %v2204
    %v2276 = vunpack.c.l.b16 %v2205
    %v2277 = vunpack.c.l.b16 %v2206
    %v2278 = vunpack.c.l.b16 %v2207
    %v2279 = vunpack.c.l.b16 %v2208
    %v2280 = vunpack.c.l.b16 %v2209
    %v2281 = vunpack.c.l.b16 %v2210
    %v2282 = vunpack.c.l.b16 %v2211
    %v2283 = vunpack.c.l.b16 %v2212
    %v2284 = vunpack.c.l.b16 %v2213
    %v2285 = vunpack.c.l.b16 %v2214
    %v2286 = vunpack.c.l.b16 %v2215
    %v2287 = vunpack.c.l.b16 %v2216
    %v2288 = vpack.c.b16 %v2257, %v2256
    %v2289 = vpack.c.b16 %v2259, %v2258
    %v2290 = vpack.c.b16 %v2261, %v2260
    %v2291 = vpack.c.b16 %v2263, %v2262
    %v2292 = vpack.c.b16 %v2265, %v2264
    %v2293 = vpack.c.b16 %v2267, %v2266
    %v2294 = vpack.c.b16 %v2269, %v2268
    %v2295 = vpack.c.b16 %v2271, %v2270
    %v2296 = vpack.c.b16 %v2273, %v2272
    %v2297 = vpack.c.b16 %v2275, %v2274
    %v2298 = vpack.c.b16 %v2277, %v2276
    %v2299 = vpack.c.b16 %v2279, %v2278
    %v2300 = vpack.c.b16 %v2281, %v2280
    %v2301 = vpack.c.b16 %v2283, %v2282
    %v2302 = vpack.c.b16 %v2285, %v2284
    %v2303 = vpack.c.b16 %v2287, %v2286
    %2320 = vmatprep.subr.bf16.mxu0 0
    %2321 = vmatpush1.bf16.msra.mxu0 %v2295
    %2322 = vmatprep.subr.bf16.mxu0 0
    %2323 = vmatpush1.bf16.msra.mxu0 %v2294
    %2324 = vmatprep.subr.bf16.mxu0 0
    %2325 = vmatpush1.bf16.msra.mxu0 %v2293
    %2326 = vmatprep.subr.bf16.mxu0 0
    %2327 = vmatpush1.bf16.msra.mxu0 %v2292
    %2328 = vmatprep.subr.bf16.mxu0 0
    %2329 = vmatpush1.bf16.msra.mxu0 %v2291
    %2330 = vmatprep.subr.bf16.mxu0 0
    %2331 = vmatpush1.bf16.msra.mxu0 %v2290
    %2332 = vmatprep.subr.bf16.mxu0 0
    %2333 = vmatpush1.bf16.msra.mxu0 %v2289
    %2334 = vmatprep.subr.bf16.mxu0 0
    %2335 = vmatpush1.bf16.msra.mxu0 %v2288
    %2336 = vmatprep.subr.bf16.mxu0 0
    %2337 = vmatpush2.bf16.msra.mxu0 %v2303
    %2338 = vmatprep.subr.bf16.mxu0 0
    %2339 = vmatpush2.bf16.msra.mxu0 %v2302
    %2340 = vmatprep.subr.bf16.mxu0 0
    %2341 = vmatpush2.bf16.msra.mxu0 %v2301
    %2342 = vmatprep.subr.bf16.mxu0 0
    %2343 = vmatpush2.bf16.msra.mxu0 %v2300
    %2344 = vmatprep.subr.bf16.mxu0 0
    %2345 = vmatpush2.bf16.msra.mxu0 %v2299
    %2346 = vmatprep.subr.bf16.mxu0 0
    %2347 = vmatpush2.bf16.msra.mxu0 %v2298
    %2348 = vmatprep.subr.bf16.mxu0 0
    %2349 = vmatpush2.bf16.msra.mxu0 %v2297
    %2350 = vmatprep.subr.bf16.mxu0 0
    %2351 = vmatpush2.bf16.msra.mxu0 %v2296
    %2352 = vmatprep.mubr.bf16.mxu0 %v2184
    %2353 = vmatmul.mubr.bf16.gmra.mxu0 %v2183
    %v2354 = vpop.f32.mrf.mxu0
    %v2355 = vadd.f32 %v2222, %v2354
    %v2356 = vpop.f32.mrf.mxu0
    %v2357 = vpop.f32.mrf.mxu0
    %v2358 = vadd.f32 %v2222, %v2357
    %v2359 = vpop.f32.mrf.mxu0
    %2360 = vdwg.mxu0
    %v2361 = vsub.f32 0.0, %v2355
    %v2362 = vsub.f32 0.0, %v2358
    %v2363 = vmul.f32 %v2361, 1.442695
    %v2364 = vpow.pop %v2363
    %v2365 = vmul.f32 %v2362, 1.442695
    %v2366 = vpow.pop %v2365
    %v2367 = vadd.f32 %v2364, 1.0
    %v2368 = vadd.f32 %v2366, 1.0
    %v2369 = vrcp.pop %v2367
    %v2370 = vrcp.pop %v2368
    %2371 = vst [vmem:[#allocation11] sm:$0xff] %v2369
    %2372 = vst [vmem:[#allocation11 + $0x8] sm:$0xff] %v2370
    // Predicated region
    $region50: #{tpu_custom_call.1} parent=1 // pred_check
      _
    $region51: #{tpu_custom_call.1} parent=1 // pred_check_branch
      %2374 = sbr.rel (0) target = $region53
    $region52: #{tpu_custom_call.1} parent=1 // pred_region
      %s2376 = ssub.s32 256, 256
      %2377 = vsyncadd [#allocation4], %s2376
      %s2378 = sshll.u32 [#allocation11], 4
      %s2379 = int_to_ptr.vmem [resolvable:$true] %s2378
      %2384 = dma.vmem_to_hbm [thread:$0]  %s2379, 256, %s7, [#allocation4], 128, 128, 8
    $region53: #{tpu_custom_call.1} parent=1 // pred_fallthru
      _
    // Predicated region
    $region54: #{tpu_custom_call.1} parent=1 // pred_check
      _
    $region55: #{tpu_custom_call.1} parent=1 // pred_check_branch
      %2386 = sbr.rel (0) target = $region57
    $region56: #{tpu_custom_call.1} parent=1 // pred_region
      %2387 = dma.done [#allocation4], 256
    $region57: #{tpu_custom_call.1} parent=1 // pred_fallthru
      _
    %2388 = vsyncpa [#allocation3], 1
    %2389 = vsyncpa [#allocation6], 1
    %2390 = vsyncpa [#allocation9], 1
    %2391 = vsyncpa [#allocation4], 1

</llo_original>
